<compile_context>
chip_gen: v6e
topology: v6e:2x2x1
jax: 0.10.0
libtpu: 0.0.40
codegen_flags: <defaults>
</compile_context>

<pallas_src>
import jax
import jax.numpy as jnp
import numpy as np
from jax.experimental import pallas as pl
from jax.experimental.pallas import tpu as pltpu

# Sub-pixel decomposition of ConvTranspose2d(kernel=4, stride=2, padding=1):
#   out[2m+py, 2l+px] = sum_{(ry,ky) in TAPS[py]} sum_{(rx,kx) in TAPS[px]}
#                           x_pad[m+ry, l+rx] @ W[ky, kx]
# with x_pad zero-padded by 1 on every side.  ry, rx only take values {0, 1, 2}, so the
# union over all parities is 9 unique shifted slabs.
_TAPS = {0: ((1, 1), (0, 3)), 1: ((2, 0), (1, 2))}
_PARITIES = [(0, 0), (0, 1), (1, 0), (1, 1)]  # parity index p = 2*py + px


def _cup_kernel(w_ref, p_ref, o_ref):
    # w_ref: (4*2*Cout, K_pad)  all-parity fused complex weights + bias column (VMEM-resident)
    # p_ref: (K_pad, H*W)       unified 9-shift tap slabs ([real|imag] Cin each) + ones row
    # o_ref: (4*2*Cout, H*W)    parity-major; within a parity rows [0,Cout)=relu(real),
    #                           rows [Cout,2Cout)=relu(imag)
    acc = jnp.dot(w_ref[...], p_ref[...], preferred_element_type=jnp.float32)
    o_ref[...] = jnp.maximum(acc, 0.0)


def cup_forward(x, wr, wi, br, bi, *, use_bf16=False):
    """x: complex64 (N, Cin, H, W) NCHW.  Returns complex64 (N, Cout, 2H, 2W)."""
    xr = jnp.real(x).astype(jnp.float32)
    xi = jnp.imag(x).astype(jnp.float32)
    N, Cin, H, W = xr.shape
    Cout = wr.shape[1]
    HW = H * W
    K = 9 * 2 * Cin + 1                  # 9 unique shifts x [real, imag] x Cin + bias row
    K_pad = ((K + 7) // 8) * 8           # cheap sublane alignment of the contraction dim

    # ---- input prep: keep channels-major (no layout transpose), pad spatial by 1.
    x_cat = jnp.concatenate([xr, xi], axis=1)                  # (N, 2*Cin, H, W)
    x_pad = jnp.pad(x_cat, ((0, 0), (0, 0), (1, 1), (1, 1)))   # (N, 2*Cin, H+2, W+2)

    # ---- unified im2col RHS over the 9 unique (ry, rx) shifts (no per-parity duplication).
    slabs = []
    for ry in range(3):
        for rx in range(3):
            slabs.append(x_pad[:, :, ry:ry + H, rx:rx + W].reshape(N, 2 * Cin, HW))
    patches = jnp.concatenate(
        slabs + [jnp.ones((N, 1, HW), jnp.float32),            # bias row
                 jnp.zeros((N, K_pad - K, HW), jnp.float32)],   # alignment pad
        axis=1)                                                 # (N, K_pad, HW)

    # ---- all-parity fused weight LHS (complex combination + bias folded in).
    # PyTorch ConvTranspose2d weight layout: (Cin, Cout, kH, kW).
    wr_f = wr.astype(jnp.float32)
    wi_f = wi.astype(jnp.float32)
    br_f = br.astype(jnp.float32)
    bi_f = bi.astype(jnp.float32)
    zero_blk = jnp.zeros((Cout, 2 * Cin), jnp.float32)
    zpad = jnp.zeros((Cout, K_pad - K), jnp.float32)
    lhs_rows = []
    for (py, px) in _PARITIES:
        used = {}
        for (ry, ky) in _TAPS[py]:
            for (rx, kx) in _TAPS[px]:
                used[3 * ry + rx] = (ky, kx)
        top_cols, bot_cols = [], []
        for s in range(9):                                      # column blocks per shift
            if s in used:
                ky, kx = used[s]
                WrT = wr_f[:, :, ky, kx].T                      # (Cout, Cin)
                WiT = wi_f[:, :, ky, kx].T
                top_cols.append(jnp.concatenate([WrT, -WiT], axis=1))   # real-out rows
                bot_cols.append(jnp.concatenate([WiT, WrT], axis=1))    # imag-out rows
            else:                                               # shift unused by this parity
                top_cols.append(zero_blk)
                bot_cols.append(zero_blk)
        top = jnp.concatenate(top_cols + [(br_f - bi_f)[:, None], zpad], axis=1)
        bot = jnp.concatenate(bot_cols + [(br_f + bi_f)[:, None], zpad], axis=1)
        lhs_rows.append(jnp.concatenate([top, bot], axis=0))    # (2*Cout, K_pad)
    lhs = jnp.concatenate(lhs_rows, axis=0)                     # (4*2*Cout, K_pad)

    # Optional bf16 MXU inputs (f32 accumulation) for v6e/v7x.
    mm_dtype = jnp.bfloat16 if use_bf16 else jnp.float32
    lhs = lhs.astype(mm_dtype)
    patches = patches.astype(mm_dtype)

    M = 4 * 2 * Cout

    # ---- Pallas call: grid over batch only, one fused matmul per step.
    out = pl.pallas_call(
        _cup_kernel,
        out_shape=jax.ShapeDtypeStruct((N, M, HW), jnp.float32),
        grid_spec=pltpu.PrefetchScalarGridSpec(
            num_scalar_prefetch=0,
            grid=(N,),
            in_specs=[
                # Whole weight array, constant index_map -> DMA'd once, stays in VMEM.
                pl.BlockSpec((M, K_pad), lambda n: (0, 0)),
                pl.BlockSpec((None, K_pad, HW), lambda n: (n, 0, 0)),
            ],
            out_specs=pl.BlockSpec((None, M, HW), lambda n: (n, 0, 0)),
        ),
        compiler_params=pltpu.CompilerParams(
            dimension_semantics=("parallel",),   # one batch element per TensorCore on v7x
        ),
    )(lhs, patches)

    # ---- pixel shuffle + real/imag split (single XLA layout pass over the output).
    o = out.reshape(N, 2, 2, 2, Cout, H, W)              # (N, py, px, ri, C, H, W)
    o = jnp.transpose(o, (0, 3, 4, 5, 1, 6, 2))          # (N, ri, C, H, py, W, px)
    o = o.reshape(N, 2, Cout, 2 * H, 2 * W)
    return jax.lax.complex(o[:, 0], o[:, 1])


if __name__ == "__main__":
    key = jax.random.PRNGKey(0)
    N, Cin, Cout, H, W = 2, 4, 8, 16, 16
    k1, k2, k3, k4, k5, k6 = jax.random.split(key, 6)

    xr = jax.random.normal(k1, (N, Cin, H, W), jnp.float32)
    xi = jax.random.normal(k2, (N, Cin, H, W), jnp.float32)
    x = jax.lax.complex(xr, xi)

    # Synthetic parameters, shapes as in ComplexConvTranspose2d(4, 8, 4, 2, 1).
    bound = 1.0 / float(np.sqrt(Cin * 4 * 4))
    wr = jax.random.uniform(k3, (Cin, Cout, 4, 4), jnp.float32, -bound, bound)
    wi = jax.random.uniform(k4, (Cin, Cout, 4, 4), jnp.float32, -bound, bound)
    br = jax.random.uniform(k5, (Cout,), jnp.float32, -bound, bound)
    bi = jax.random.uniform(k6, (Cout,), jnp.float32, -bound, bound)

    fwd_f32 = jax.jit(lambda *a: cup_forward(*a, use_bf16=False))
    fwd_bf16 = jax.jit(lambda *a: cup_forward(*a, use_bf16=True))

    out = jax.block_until_ready(fwd_f32(x, wr, wi, br, bi))
    out_bf16 = jax.block_until_ready(fwd_bf16(x, wr, wi, br, bi))

    # Pure-JAX reference: lhs-dilated conv with flipped kernel == PyTorch ConvTranspose2d.
    def convT(a, w, b):
        rhs = jnp.transpose(w[:, :, ::-1, ::-1], (1, 0, 2, 3))  # (Cout, Cin, 4, 4)
        y = jax.lax.conv_general_dilated(
            a, rhs, window_strides=(1, 1), padding=((2, 2), (2, 2)),
            lhs_dilation=(2, 2), dimension_numbers=("NCHW", "OIHW", "NCHW"))
        return y + b[None, :, None, None]

    ref_r = jnp.maximum(convT(xr, wr, br) - convT(xi, wi, bi), 0.0)
    ref_i = jnp.maximum(convT(xi, wr, br) + convT(xr, wi, bi), 0.0)

    assert out.shape == (N, Cout, 2 * H, 2 * W) and out.dtype == jnp.complex64
    np.testing.assert_allclose(np.asarray(out.real), np.asarray(ref_r), rtol=1e-4, atol=1e-4)
    np.testing.assert_allclose(np.asarray(out.imag), np.asarray(ref_i), rtol=1e-4, atol=1e-4)
    # bf16 MXU-input path (looser tolerance; intended for v6e/v7x deployments).
    np.testing.assert_allclose(np.asarray(out_bf16.real), np.asarray(ref_r), rtol=3e-2, atol=3e-2)
    np.testing.assert_allclose(np.asarray(out_bf16.imag), np.asarray(ref_i), rtol=3e-2, atol=3e-2)
    print("KERNEL_OK")
</pallas_src>

<mosaic_0001>
module attributes {stable_mosaic.version = 11 : i64} {
  func.func @_cup_kernel(%arg0: i32, %arg1: memref<64x80xf32, #tpu.memory_space<vmem>>, %arg2: memref<1x80x256xf32, #tpu.memory_space<vmem>>, %arg3: memref<1x64x256xf32, #tpu.memory_space<vmem>>) attributes {dimension_semantics = [#tpu.dimension_semantics<parallel>], iteration_bounds = array<i64: 2>, scalar_prefetch = 0 : i64, scratch_operands = 0 : i64, tpu.core_type = #tpu.core_type<tc>, window_params = [{pipeline_mode = #tpu.pipeline_mode<synchronous>, transform_indices = @transform_0, window_bounds = array<i64: 64, 80>}, {transform_indices = @transform_1, window_bounds = array<i64: 1, 80, 256>}, {transform_indices = @transform_2, window_bounds = array<i64: 1, 64, 256>}]} {
    %c0 = arith.constant 0 : index
    %c0_0 = arith.constant 0 : index
    %0 = vector.load %arg1[%c0, %c0_0] : memref<64x80xf32, #tpu.memory_space<vmem>>, vector<64x80xf32>
    %c0_1 = arith.constant 0 : index
    %c0_2 = arith.constant 0 : index
    %c0_3 = arith.constant 0 : index
    %1 = vector.load %arg2[%c0_1, %c0_2, %c0_3] : memref<1x80x256xf32, #tpu.memory_space<vmem>>, vector<1x80x256xf32>
    %2 = vector.shape_cast %1 : vector<1x80x256xf32> to vector<80x256xf32>
    %cst = arith.constant dense<0.000000e+00> : vector<64x256xf32>
    %3 = tpu.matmul %0, %2, %cst {dimension_numbers = #tpu.dot_dimension_numbers<[1], [0], [0], [1], [0, 0, 1, 1], [], []>} : vector<64x80xf32>, vector<80x256xf32>, vector<64x256xf32> -> vector<64x256xf32>
    %cst_4 = arith.constant 0.000000e+00 : f32
    %4 = vector.broadcast %cst_4 : f32 to vector<64x256xf32>
    %5 = arith.maximumf %3, %4 : vector<64x256xf32>
    %c0_5 = arith.constant 0 : index
    %c0_6 = arith.constant 0 : index
    %c0_7 = arith.constant 0 : index
    %6 = vector.load %arg3[%c0_5, %c0_6, %c0_7] : memref<1x64x256xf32, #tpu.memory_space<vmem>>, vector<1x64x256xf32>
    %7 = vector.shape_cast %6 : vector<1x64x256xf32> to vector<64x256xf32>
    %8 = vector.shape_cast %5 : vector<64x256xf32> to vector<1x64x256xf32>
    tpu.vector_store %arg3[%c0_5, %c0_6, %c0_7], %8 {strides = array<i32>} : memref<1x64x256xf32, #tpu.memory_space<vmem>>, vector<1x64x256xf32>,
    return
  }
  func.func @transform_0(%arg0: i32) -> (i32, i32) {
    %c0_i32 = arith.constant 0 : i32
    %c0_i32_0 = arith.constant 0 : i32
    %c0_i32_1 = arith.constant 0 : i32
    return %c0_i32, %c0_i32_0 : i32, i32
  }
  func.func @transform_1(%arg0: i32) -> (i32, i32, i32) {
    %c0_i32 = arith.constant 0 : i32
    %c0_i32_0 = arith.constant 0 : i32
    %c0_i32_1 = arith.constant 0 : i32
    return %arg0, %c0_i32, %c0_i32_0 : i32, i32, i32
  }
  func.func @transform_2(%arg0: i32) -> (i32, i32, i32) {
    %c0_i32 = arith.constant 0 : i32
    %c0_i32_0 = arith.constant 0 : i32
    %c0_i32_1 = arith.constant 0 : i32
    return %arg0, %c0_i32, %c0_i32_0 : i32, i32, i32
  }
}

</mosaic_0001>

<llo_original>
// kernel: custom-call.1
$region0: #{custom-call.1}
  %s0 = inlined_call_operand.hbm [shape: c64[2,4,16,16], index: 0, kind: input, shape index: {}]
  %s1 = inlined_call_operand.vmem [shape: f32[2,4,16,16], index: 1, kind: output, shape index: {}]
  %s2 = scalar_lea.hbm %s0, 2048
  $region1: #{custom-call.1} parent=0
    #allocation0 [shape = 's32[1]{0}', space=sflag, size = 0x4, scoped, tag = 'scoped memory for custom-call.1']
    %3 = vsyncpa [#allocation0], 0
    %s4 = sshll.u32 %s1, 4
    %s5 = int_to_ptr.vmem [resolvable:$true] %s4
    %7 = dma.hbm_to_vmem [thread:$0]  %s2, 2048, %s5, [#allocation0]
    %8 = dma.done [#allocation0], 2048
    %9 = vsyncpa [#allocation0], 1

// kernel: custom-call
$region0: #{custom-call}
  %s0 = inlined_call_operand.hbm [shape: c64[2,4,16,16], index: 0, kind: input, shape index: {}]
  %s1 = inlined_call_operand.vmem [shape: f32[2,4,16,16], index: 1, kind: output, shape index: {}]
  $region1: #{custom-call} parent=0
    #allocation0 [shape = 's32[1]{0}', space=sflag, size = 0x4, scoped, tag = 'scoped memory for custom-call']
    %2 = vsyncpa [#allocation0], 0
    %s3 = sshll.u32 %s1, 4
    %s4 = int_to_ptr.vmem [resolvable:$true] %s3
    %6 = dma.hbm_to_vmem [thread:$0]  %s0, 2048, %s4, [#allocation0]
    %7 = dma.done [#allocation0], 2048
    %8 = vsyncpa [#allocation0], 1

// kernel: _lambda_.1
$region0: #{_lambda_.1}
  #allocation0 [shape = 'u32[]', space=smem, size = 0x4, offset = 0x4, fixed_abs, tag = 'smem constant byte address 0x4 - core index']
  #allocation1 [shape = 'u32[144,128]{1,0:T(1,128)}', space=vmem, size = 0x12000, scoped, tag = 'internal scratch']
  %s0 = inlined_call_operand.vmem [shape: f32[64,80], index: 0, kind: input, shape index: {}]
  %s1 = inlined_call_operand.vmem [shape: f32[2,80,256], index: 1, kind: input, shape index: {}]
  %s2 = inlined_call_operand.vmem [shape: f32[2,64,256], index: 2, kind: output, shape index: {}]
  %s3 = sld [smem:[#allocation0]]
  $region41: #{_lambda_.1} parent=0
    _
  %s5 = ssub.s32 1, %s3
  %s6 = scalar_select 0, %s5, %s3
  loop: start=0, step=1, limit=4
  $region2: #{_lambda_.1} parent=0 // loop_pre_header
    _
  $region3: #{_lambda_.1} parent=0 // loop_header
    %s8 = sphi 0, %s12
    %p9 = scmp.ge.s32.totalorder %s8, 4
    %s16 = sphi 0, %s16
    %s18 = sphi 0, %s16
    %s19 = sphi 0, %s18
    %s33 = sphi 0, %s19
    %s39 = sphi 0, %s41
    %s42 = sphi 0, %s39
    %s43 = sphi 0, %s42
    %s59 = sphi 0, %s43
    %s65 = sphi 0, %s67
    %s68 = sphi 0, %s65
    %s69 = sphi 0, %s68
    %s85 = sphi 0, %s69
  $region4: #{_lambda_.1} parent=0 // loop_header_branch
    %11 = sbr.rel (%p9) target = $region8
  $region5: #{_lambda_.1} parent=0 // loop_body
    %s13 = ssub.s32 %s8, 1
    %s14 = ssub.s32 %s8, 2
    %s15 = sadd.s32 %s8, 1
    %s17 = sadd.s32 %s16, 1
    %p20 = scmp.eq.s32.totalorder %s8, 1
    %p21 = scmp.ne.s32.totalorder %s16, %s18
    %p22 = scmp.eq.s32.totalorder %s8, 0
    %p23 = por %p21, %p22
    %p24 = scmp.ne.s32.totalorder %s16, %s18
    %p25 = scmp.eq.s32.totalorder %s13, 1
    %p26 = por %p24, %p25
    %p27 = scmp.ne.s32.totalorder %s18, %s19
    %p28 = scmp.eq.s32.totalorder %s13, 0
    %p29 = por %p27, %p28
    %p30 = scmp.ne.s32.totalorder %s18, %s19
    %p31 = scmp.eq.s32.totalorder %s14, 1
    %p32 = por %p30, %p31
    %p34 = scmp.ne.s32.totalorder %s19, %s33
    %p35 = scmp.eq.s32.totalorder %s14, 0
    %p36 = por %p34, %p35
    %s37 = ssub.s32 %s8, %s15
    %p38 = scmp.eq.s32.totalorder %s37, 0
    %s40 = sadd.s32 %s39, 1
    %s41 = scalar_select %p38, %s39, %s40
    %p44 = pneg %p38
    %p45 = scmp.eq.s32.totalorder %s8, 1
    %p46 = por %p44, %p45
    %p47 = scmp.ne.s32.totalorder %s39, %s42
    %p48 = scmp.eq.s32.totalorder %s8, 0
    %p49 = por %p47, %p48
    %p50 = scmp.ne.s32.totalorder %s39, %s42
    %p51 = scmp.eq.s32.totalorder %s13, 1
    %p52 = por %p50, %p51
    %p53 = scmp.ne.s32.totalorder %s42, %s43
    %p54 = scmp.eq.s32.totalorder %s13, 0
    %p55 = por %p53, %p54
    %p56 = scmp.ne.s32.totalorder %s42, %s43
    %p57 = scmp.eq.s32.totalorder %s14, 1
    %p58 = por %p56, %p57
    %p60 = scmp.ne.s32.totalorder %s43, %s59
    %p61 = scmp.eq.s32.totalorder %s14, 0
    %p62 = por %p60, %p61
    %s63 = ssub.s32 %s8, %s15
    %p64 = scmp.eq.s32.totalorder %s63, 0
    %s66 = sadd.s32 %s65, 1
    %s67 = scalar_select %p64, %s65, %s66
    %p70 = pneg %p64
    %p71 = scmp.eq.s32.totalorder %s8, 1
    %p72 = por %p70, %p71
    %p73 = scmp.ne.s32.totalorder %s65, %s68
    %p74 = scmp.eq.s32.totalorder %s8, 0
    %p75 = por %p73, %p74
    %p76 = scmp.ne.s32.totalorder %s65, %s68
    %p77 = scmp.eq.s32.totalorder %s13, 1
    %p78 = por %p76, %p77
    %p79 = scmp.ne.s32.totalorder %s68, %s69
    %p80 = scmp.eq.s32.totalorder %s13, 0
    %p81 = por %p79, %p80
    %p82 = scmp.ne.s32.totalorder %s68, %s69
    %p83 = scmp.eq.s32.totalorder %s14, 1
    %p84 = por %p82, %p83
    %p86 = scmp.ne.s32.totalorder %s69, %s85
    %p87 = scmp.eq.s32.totalorder %s14, 0
    %p88 = por %p86, %p87
    %p89 = scmp.le.s32.totalorder 1, %s8
    %p90 = scmp.lt.s32.totalorder %s8, 3
    %p91 = pnand %p89, %p90
    %p92 = pneg %p91
    // Predicated region
    $region9: #{_lambda_.1} parent=5 // pred_check
      _
    $region10: #{_lambda_.1} parent=5 // pred_check_branch
      %94 = sbr.rel (%p91) target = $region12
    $region11: #{_lambda_.1} parent=5 // pred_region
      %s95 = ssub.s32 %s8, 1
      // Predicated region
      $region13: #{_lambda_.1} parent=11 // pred_check
        %p96 = pneg %p29
      $region14: #{_lambda_.1} parent=11 // pred_check_branch
        %98 = sbr.rel (%p96) target = $region16
      $region15: #{_lambda_.1} parent=11 // pred_region
        _
      $region16: #{_lambda_.1} parent=11 // pred_fallthru
        _
    $region12: #{_lambda_.1} parent=5 // pred_fallthru
      _
    %p99 = scmp.lt.s32.totalorder %s8, 2
    // Predicated region
    $region17: #{_lambda_.1} parent=5 // pred_check
      %p100 = pneg %p99
    $region18: #{_lambda_.1} parent=5 // pred_check_branch
      %102 = sbr.rel (%p100) target = $region20
    $region19: #{_lambda_.1} parent=5 // pred_region
      // Predicated region
      $region21: #{_lambda_.1} parent=19 // pred_check
        %p103 = pneg %p49
      $region22: #{_lambda_.1} parent=19 // pred_check_branch
        %105 = sbr.rel (%p103) target = $region24
      $region23: #{_lambda_.1} parent=19 // pred_region
        %p106 = scmp.lt.s32.totalorder %s8, 1
        %s107 = scalar_select %p106, %s8, 1
        %s108 = smul.addr %s107, 20
        %s109 = smul.addr %s108, 8
        %s110 = scalar_lea.vmem %s1, %s109
      $region24: #{_lambda_.1} parent=19 // pred_fallthru
        _
    $region20: #{_lambda_.1} parent=5 // pred_fallthru
      _
    %p111 = scmp.le.s32.totalorder 1, %s8
    %p112 = scmp.lt.s32.totalorder %s8, 3
    %p113 = pnand %p111, %p112
    %p114 = pneg %p113
    // Predicated region
    $region25: #{_lambda_.1} parent=5 // pred_check
      _
    $region26: #{_lambda_.1} parent=5 // pred_check_branch
      %116 = sbr.rel (%p113) target = $region28
    $region27: #{_lambda_.1} parent=5 // pred_region
      %s117 = ssub.s32 %s8, 1
      %p118 = pneg %p29
      %p119 = pneg %p26
      %p120 = scmp.lt.s32.totalorder %s13, 1
      %s121 = scalar_select %p120, %s13, 1
      %s122 = smul.addr %s121, 20
      %s123 = smul.addr %s122, 8
      %s124 = scalar_lea.vmem %s1, %s123
      %p125 = pneg %p55
      %p126 = pneg %p52
      %p127 = pneg %p81
      %p128 = pneg %p78
      %p129 = scmp.lt.s32.totalorder %s13, 1
      %s130 = scalar_select %p129, %s13, 1
      %s131 = smul.addr %s130, 16
      %s132 = smul.addr %s131, 8
      %s133 = scalar_lea.vmem %s2, %s132
      %p134 = scmp.lt.s32.totalorder %s13, 1
      %s135 = scalar_select %p134, %s13, 1
      %s136 = smul.addr %s135, 20
      %s137 = smul.addr %s136, 8
      %s138 = scalar_lea.vmem %s1, %s137
      %p139 = scmp.lt.s32.totalorder %s13, 1
      %s140 = scalar_select %p139, %s13, 1
      %s141 = smul.addr %s140, 16
      %s142 = smul.addr %s141, 8
      %s143 = scalar_lea.vmem %s2, %s142
      %v144 = vld [vmem:[%s0] sm:$0xff]
      %v145 = vld [vmem:[%s0 + $0x8] sm:$0xff]
      %v146 = vld [vmem:[%s0 + $0x10] sm:$0xff]
      %v147 = vld [vmem:[%s0 + $0x18] sm:$0xff]
      %v148 = vld [vmem:[%s0 + $0x20] sm:$0xff]
      %v149 = vld [vmem:[%s0 + $0x28] sm:$0xff]
      %v150 = vld [vmem:[%s0 + $0x30] sm:$0xff]
      %v151 = vld [vmem:[%s0 + $0x38] sm:$0xff]
      %v152 = vld [vmem:[%s138] sm:$0xff]
      %v153 = vld [vmem:[%s138 + $0x8] sm:$0xff]
      %v154 = vld [vmem:[%s138 + $0x10] sm:$0xff]
      %v155 = vld [vmem:[%s138 + $0x18] sm:$0xff]
      %v156 = vld [vmem:[%s138 + $0x20] sm:$0xff]
      %v157 = vld [vmem:[%s138 + $0x28] sm:$0xff]
      %v158 = vld [vmem:[%s138 + $0x30] sm:$0xff]
      %v159 = vld [vmem:[%s138 + $0x38] sm:$0xff]
      %v160 = vld [vmem:[%s138 + $0x40] sm:$0xff]
      %v161 = vld [vmem:[%s138 + $0x48] sm:$0xff]
      %v162 = vld [vmem:[%s138 + $0x50] sm:$0xff]
      %v163 = vld [vmem:[%s138 + $0x58] sm:$0xff]
      %v164 = vld [vmem:[%s138 + $0x60] sm:$0xff]
      %v165 = vld [vmem:[%s138 + $0x68] sm:$0xff]
      %v166 = vld [vmem:[%s138 + $0x70] sm:$0xff]
      %v167 = vld [vmem:[%s138 + $0x78] sm:$0xff]
      %v168 = vld [vmem:[%s138 + $0x80] sm:$0xff]
      %v169 = vld [vmem:[%s138 + $0x88] sm:$0xff]
      %v170 = vld [vmem:[%s138 + $0x90] sm:$0xff]
      %v171 = vld [vmem:[%s138 + $0x98] sm:$0xff]
      %vm172 = vcmask 654336
      %v174 = vsel %vm172, %v144, 0
      %v177 = vsel %vm172, %v145, 0
      %v180 = vsel %vm172, %v146, 0
      %v183 = vsel %vm172, %v147, 0
      %v186 = vsel %vm172, %v148, 0
      %v189 = vsel %vm172, %v149, 0
      %v192 = vsel %vm172, %v150, 0
      %v195 = vsel %vm172, %v151, 0
      %197 = vmatprep.subr.mxu0 0.0
      %198 = vmatpush1.msra.mxu0 0.0
      %199 = vmatprep.subr.mxu0 0.0
      %200 = vmatpush1.msra.mxu0 0.0
      %201 = vmatprep.subr.mxu0 0.0
      %202 = vmatpush1.msra.mxu0 0.0
      %203 = vmatprep.subr.mxu0 0.0
      %204 = vmatpush1.msra.mxu0 0.0
      %205 = vmatprep.subr.mxu0 0.0
      %206 = vmatpush1.msra.mxu0 0.0
      %207 = vmatprep.subr.mxu0 0.0
      %208 = vmatpush1.msra.mxu0 0.0
      %209 = vmatprep.subr.mxu0 %v171
      %210 = vmatpush1.msra.mxu0 %v170
      %211 = vmatprep.subr.mxu0 %v169
      %212 = vmatpush1.msra.mxu0 %v168
      %213 = vmatprep.subr.mxu0 %v167
      %214 = vmatpush1.msra.mxu0 %v166
      %215 = vmatprep.subr.mxu0 %v165
      %216 = vmatpush1.msra.mxu0 %v164
      %217 = vmatprep.subr.mxu0 %v163
      %218 = vmatpush1.msra.mxu0 %v162
      %219 = vmatprep.subr.mxu0 %v161
      %220 = vmatpush1.msra.mxu0 %v160
      %221 = vmatprep.subr.mxu0 %v159
      %222 = vmatpush1.msra.mxu0 %v158
      %223 = vmatprep.subr.mxu0 %v157
      %224 = vmatpush1.msra.mxu0 %v156
      %225 = vmatprep.subr.mxu0 %v155
      %226 = vmatpush1.msra.mxu0 %v154
      %227 = vmatprep.subr.mxu0 %v153
      %228 = vmatpush1.msra.mxu0 %v152
      %229 = vmatprep.subr.mxu0 0.0
      %230 = vmatpush2.msra.mxu0 0.0
      %231 = vmatprep.subr.mxu0 0.0
      %232 = vmatpush2.msra.mxu0 0.0
      %233 = vmatprep.subr.mxu0 0.0
      %234 = vmatpush2.msra.mxu0 0.0
      %235 = vmatprep.subr.mxu0 0.0
      %236 = vmatpush2.msra.mxu0 0.0
      %237 = vmatprep.subr.mxu0 0.0
      %238 = vmatpush2.msra.mxu0 0.0
      %239 = vmatprep.subr.mxu0 0.0
      %240 = vmatpush2.msra.mxu0 0.0
      %241 = vmatprep.subr.mxu0 0.0
      %242 = vmatpush2.msra.mxu0 0.0
      %243 = vmatprep.subr.mxu0 0.0
      %244 = vmatpush2.msra.mxu0 0.0
      %245 = vmatprep.subr.mxu0 0.0
      %246 = vmatpush2.msra.mxu0 0.0
      %247 = vmatprep.subr.mxu0 0.0
      %248 = vmatpush2.msra.mxu0 0.0
      %249 = vmatprep.subr.mxu0 0.0
      %250 = vmatpush2.msra.mxu0 0.0
      %251 = vmatprep.subr.mxu0 0.0
      %252 = vmatpush2.msra.mxu0 0.0
      %253 = vmatprep.subr.mxu0 0.0
      %254 = vmatpush2.msra.mxu0 0.0
      %255 = vmatprep.subr.mxu0 0.0
      %256 = vmatpush2.msra.mxu0 0.0
      %257 = vmatprep.subr.mxu0 0.0
      %258 = vmatpush2.msra.mxu0 0.0
      %259 = vmatprep.subr.mxu0 0.0
      %260 = vmatpush2.msra.mxu0 0.0
      %261 = vmatprep.mubr.f32.mxu0 0.0
      %262 = vmatmul.mubr.f32.gmra.mxu0 %v174
      %v263 = vpop.f32.mrf.mxu0
      %v264 = vadd.f32 0.0, %v263
      %v265 = vpop.f32.mrf.mxu0
      %v266 = vadd.f32 0.0, %v265
      %267 = vmatprep.mubr.f32.mxu0 0.0
      %268 = vmatmul.mubr.f32.gmra.mxu0 %v177
      %v269 = vpop.f32.mrf.mxu0
      %v270 = vadd.f32 0.0, %v269
      %v271 = vpop.f32.mrf.mxu0
      %v272 = vadd.f32 0.0, %v271
      %273 = vmatprep.mubr.f32.mxu0 0.0
      %274 = vmatmul.mubr.f32.gmra.mxu0 %v180
      %v275 = vpop.f32.mrf.mxu0
      %v276 = vadd.f32 0.0, %v275
      %v277 = vpop.f32.mrf.mxu0
      %v278 = vadd.f32 0.0, %v277
      %279 = vmatprep.mubr.f32.mxu0 0.0
      %280 = vmatmul.mubr.f32.gmra.mxu0 %v183
      %v281 = vpop.f32.mrf.mxu0
      %v282 = vadd.f32 0.0, %v281
      %v283 = vpop.f32.mrf.mxu0
      %v284 = vadd.f32 0.0, %v283
      %285 = vmatprep.mubr.f32.mxu0 0.0
      %286 = vmatmul.mubr.f32.gmra.mxu0 %v186
      %v287 = vpop.f32.mrf.mxu0
      %v288 = vadd.f32 0.0, %v287
      %v289 = vpop.f32.mrf.mxu0
      %v290 = vadd.f32 0.0, %v289
      %291 = vmatprep.mubr.f32.mxu0 0.0
      %292 = vmatmul.mubr.f32.gmra.mxu0 %v189
      %v293 = vpop.f32.mrf.mxu0
      %v294 = vadd.f32 0.0, %v293
      %v295 = vpop.f32.mrf.mxu0
      %v296 = vadd.f32 0.0, %v295
      %297 = vmatprep.mubr.f32.mxu0 0.0
      %298 = vmatmul.mubr.f32.gmra.mxu0 %v192
      %v299 = vpop.f32.mrf.mxu0
      %v300 = vadd.f32 0.0, %v299
      %v301 = vpop.f32.mrf.mxu0
      %v302 = vadd.f32 0.0, %v301
      %303 = vmatprep.mubr.f32.mxu0 0.0
      %304 = vmatmul.mubr.f32.gmra.mxu0 %v195
      %v305 = vpop.f32.mrf.mxu0
      %v306 = vadd.f32 0.0, %v305
      %v307 = vpop.f32.mrf.mxu0
      %v308 = vadd.f32 0.0, %v307
      %309 = vdwg.mxu0
      %v310 = vmax.f32 %v264, 0.0
      %v311 = vmax.f32 %v266, 0.0
      %v312 = vmax.f32 %v270, 0.0
      %v313 = vmax.f32 %v272, 0.0
      %v314 = vmax.f32 %v276, 0.0
      %v315 = vmax.f32 %v278, 0.0
      %v316 = vmax.f32 %v282, 0.0
      %v317 = vmax.f32 %v284, 0.0
      %v318 = vmax.f32 %v288, 0.0
      %v319 = vmax.f32 %v290, 0.0
      %v320 = vmax.f32 %v294, 0.0
      %v321 = vmax.f32 %v296, 0.0
      %v322 = vmax.f32 %v300, 0.0
      %v323 = vmax.f32 %v302, 0.0
      %v324 = vmax.f32 %v306, 0.0
      %v325 = vmax.f32 %v308, 0.0
      %326 = vst [vmem:[%s143] sm:$0xff] %v310
      %327 = vst [vmem:[%s143 + $0x8] sm:$0xff] %v311
      %328 = vst [vmem:[%s143 + $0x10] sm:$0xff] %v312
      %329 = vst [vmem:[%s143 + $0x18] sm:$0xff] %v313
      %330 = vst [vmem:[%s143 + $0x20] sm:$0xff] %v314
      %331 = vst [vmem:[%s143 + $0x28] sm:$0xff] %v315
      %332 = vst [vmem:[%s143 + $0x30] sm:$0xff] %v316
      %333 = vst [vmem:[%s143 + $0x38] sm:$0xff] %v317
      %334 = vst [vmem:[%s143 + $0x40] sm:$0xff] %v318
      %335 = vst [vmem:[%s143 + $0x48] sm:$0xff] %v319
      %336 = vst [vmem:[%s143 + $0x50] sm:$0xff] %v320
      %337 = vst [vmem:[%s143 + $0x58] sm:$0xff] %v321
      %338 = vst [vmem:[%s143 + $0x60] sm:$0xff] %v322
      %339 = vst [vmem:[%s143 + $0x68] sm:$0xff] %v323
      %340 = vst [vmem:[%s143 + $0x70] sm:$0xff] %v324
      %341 = vst [vmem:[%s143 + $0x78] sm:$0xff] %v325
      %p342 = scmp.lt.s32.totalorder %s13, 1
      %s343 = scalar_select %p342, %s13, 1
      %s344 = smul.addr %s343, 16
      %s345 = smul.addr %s344, 8
      %s346 = scalar_lea.vmem %s2, %s345
      // Predicated region
      $region29: #{_lambda_.1} parent=27 // pred_check
        %p347 = pneg %p78
      $region30: #{_lambda_.1} parent=27 // pred_check_branch
        %349 = sbr.rel (%p347) target = $region32
      $region31: #{_lambda_.1} parent=27 // pred_region
        _
      $region32: #{_lambda_.1} parent=27 // pred_fallthru
        _
    $region28: #{_lambda_.1} parent=5 // pred_fallthru
      _
    %p350 = scmp.le.s32.totalorder 2, %s8
    // Predicated region
    $region33: #{_lambda_.1} parent=5 // pred_check
      %p351 = pneg %p350
    $region34: #{_lambda_.1} parent=5 // pred_check_branch
      %353 = sbr.rel (%p351) target = $region36
    $region35: #{_lambda_.1} parent=5 // pred_region
      %s354 = ssub.s32 %s8, 2
      // Predicated region
      $region37: #{_lambda_.1} parent=35 // pred_check
        %p355 = pneg %p84
      $region38: #{_lambda_.1} parent=35 // pred_check_branch
        %357 = sbr.rel (%p355) target = $region40
      $region39: #{_lambda_.1} parent=35 // pred_region
        %p358 = scmp.lt.s32.totalorder %s14, 1
        %s359 = scalar_select %p358, %s14, 1
        %s360 = smul.addr %s359, 16
        %s361 = smul.addr %s360, 8
        %s362 = scalar_lea.vmem %s2, %s361
      $region40: #{_lambda_.1} parent=35 // pred_fallthru
        _
    $region36: #{_lambda_.1} parent=5 // pred_fallthru
      _
  $region6: #{_lambda_.1} parent=0 // loop_footer
    %s12 = sadd.s32 1, %s8
  $region7: #{_lambda_.1} parent=0 // loop_footer_branch
    %7 = sbr.rel target = $region3
  $region8: #{_lambda_.1} parent=0 // loop_exit
    _

// kernel: custom-call.2
$region0: #{custom-call.2}
  %s0 = inlined_call_operand.vmem [shape: f32[2,8,32,32], index: 0, kind: input, shape index: {}]
  %s1 = inlined_call_operand.vmem [shape: f32[2,8,32,32], index: 1, kind: input, shape index: {}]
  %s2 = inlined_call_operand.vmem [shape: c64[2,8,32,32], index: 2, kind: output, shape index: {}]
  %s4 = scalar_lea.vmem %s2, 2048
  %v5 = vld [vmem:[%s0] sm:$0xff]
  %6 = vst [vmem:[%s2] sm:$0xff] %v5
  %s7 = scalar_lea.vmem %s2, 8
  %s8 = scalar_lea.vmem %s0, 8
  %v9 = vld [vmem:[%s8] sm:$0xff]
  %10 = vst [vmem:[%s7] sm:$0xff] %v9
  %s11 = scalar_lea.vmem %s2, 16
  %s12 = scalar_lea.vmem %s0, 16
  %v13 = vld [vmem:[%s12] sm:$0xff]
  %14 = vst [vmem:[%s11] sm:$0xff] %v13
  %s15 = scalar_lea.vmem %s2, 24
  %s16 = scalar_lea.vmem %s0, 24
  %v17 = vld [vmem:[%s16] sm:$0xff]
  %18 = vst [vmem:[%s15] sm:$0xff] %v17
  %s19 = scalar_lea.vmem %s2, 32
  %s20 = scalar_lea.vmem %s0, 32
  %v21 = vld [vmem:[%s20] sm:$0xff]
  %22 = vst [vmem:[%s19] sm:$0xff] %v21
  %s23 = scalar_lea.vmem %s2, 40
  %s24 = scalar_lea.vmem %s0, 40
  %v25 = vld [vmem:[%s24] sm:$0xff]
  %26 = vst [vmem:[%s23] sm:$0xff] %v25
  %s27 = scalar_lea.vmem %s2, 48
  %s28 = scalar_lea.vmem %s0, 48
  %v29 = vld [vmem:[%s28] sm:$0xff]
  %30 = vst [vmem:[%s27] sm:$0xff] %v29
  %s31 = scalar_lea.vmem %s2, 56
  %s32 = scalar_lea.vmem %s0, 56
  %v33 = vld [vmem:[%s32] sm:$0xff]
  %34 = vst [vmem:[%s31] sm:$0xff] %v33
  %s35 = scalar_lea.vmem %s2, 64
  %s36 = scalar_lea.vmem %s0, 64
  %v37 = vld [vmem:[%s36] sm:$0xff]
  %38 = vst [vmem:[%s35] sm:$0xff] %v37
  %s39 = scalar_lea.vmem %s2, 72
  %s40 = scalar_lea.vmem %s0, 72
  %v41 = vld [vmem:[%s40] sm:$0xff]
  %42 = vst [vmem:[%s39] sm:$0xff] %v41
  %s43 = scalar_lea.vmem %s2, 80
  %s44 = scalar_lea.vmem %s0, 80
  %v45 = vld [vmem:[%s44] sm:$0xff]
  %46 = vst [vmem:[%s43] sm:$0xff] %v45
  %s47 = scalar_lea.vmem %s2, 88
  %s48 = scalar_lea.vmem %s0, 88
  %v49 = vld [vmem:[%s48] sm:$0xff]
  %50 = vst [vmem:[%s47] sm:$0xff] %v49
  %s51 = scalar_lea.vmem %s2, 96
  %s52 = scalar_lea.vmem %s0, 96
  %v53 = vld [vmem:[%s52] sm:$0xff]
  %54 = vst [vmem:[%s51] sm:$0xff] %v53
  %s55 = scalar_lea.vmem %s2, 104
  %s56 = scalar_lea.vmem %s0, 104
  %v57 = vld [vmem:[%s56] sm:$0xff]
  %58 = vst [vmem:[%s55] sm:$0xff] %v57
  %s59 = scalar_lea.vmem %s2, 112
  %s60 = scalar_lea.vmem %s0, 112
  %v61 = vld [vmem:[%s60] sm:$0xff]
  %62 = vst [vmem:[%s59] sm:$0xff] %v61
  %s63 = scalar_lea.vmem %s2, 120
  %s64 = scalar_lea.vmem %s0, 120
  %v65 = vld [vmem:[%s64] sm:$0xff]
  %66 = vst [vmem:[%s63] sm:$0xff] %v65
  %s67 = scalar_lea.vmem %s2, 128
  %s68 = scalar_lea.vmem %s0, 128
  %v69 = vld [vmem:[%s68] sm:$0xff]
  %70 = vst [vmem:[%s67] sm:$0xff] %v69
  %s71 = scalar_lea.vmem %s2, 136
  %s72 = scalar_lea.vmem %s0, 136
  %v73 = vld [vmem:[%s72] sm:$0xff]
  %74 = vst [vmem:[%s71] sm:$0xff] %v73
  %s75 = scalar_lea.vmem %s2, 144
  %s76 = scalar_lea.vmem %s0, 144
  %v77 = vld [vmem:[%s76] sm:$0xff]
  %78 = vst [vmem:[%s75] sm:$0xff] %v77
  %s79 = scalar_lea.vmem %s2, 152
  %s80 = scalar_lea.vmem %s0, 152
  %v81 = vld [vmem:[%s80] sm:$0xff]
  %82 = vst [vmem:[%s79] sm:$0xff] %v81
  %s83 = scalar_lea.vmem %s2, 160
  %s84 = scalar_lea.vmem %s0, 160
  %v85 = vld [vmem:[%s84] sm:$0xff]
  %86 = vst [vmem:[%s83] sm:$0xff] %v85
  %s87 = scalar_lea.vmem %s2, 168
  %s88 = scalar_lea.vmem %s0, 168
  %v89 = vld [vmem:[%s88] sm:$0xff]
  %90 = vst [vmem:[%s87] sm:$0xff] %v89
  %s91 = scalar_lea.vmem %s2, 176
  %s92 = scalar_lea.vmem %s0, 176
  %v93 = vld [vmem:[%s92] sm:$0xff]
  %94 = vst [vmem:[%s91] sm:$0xff] %v93
  %s95 = scalar_lea.vmem %s2, 184
  %s96 = scalar_lea.vmem %s0, 184
  %v97 = vld [vmem:[%s96] sm:$0xff]
  %98 = vst [vmem:[%s95] sm:$0xff] %v97
  %s99 = scalar_lea.vmem %s2, 192
  %s100 = scalar_lea.vmem %s0, 192
  %v101 = vld [vmem:[%s100] sm:$0xff]
  %102 = vst [vmem:[%s99] sm:$0xff] %v101
  %s103 = scalar_lea.vmem %s2, 200
  %s104 = scalar_lea.vmem %s0, 200
  %v105 = vld [vmem:[%s104] sm:$0xff]
  %106 = vst [vmem:[%s103] sm:$0xff] %v105
  %s107 = scalar_lea.vmem %s2, 208
  %s108 = scalar_lea.vmem %s0, 208
  %v109 = vld [vmem:[%s108] sm:$0xff]
  %110 = vst [vmem:[%s107] sm:$0xff] %v109
  %s111 = scalar_lea.vmem %s2, 216
  %s112 = scalar_lea.vmem %s0, 216
  %v113 = vld [vmem:[%s112] sm:$0xff]
  %114 = vst [vmem:[%s111] sm:$0xff] %v113
  %s115 = scalar_lea.vmem %s2, 224
  %s116 = scalar_lea.vmem %s0, 224
  %v117 = vld [vmem:[%s116] sm:$0xff]
  %118 = vst [vmem:[%s115] sm:$0xff] %v117
  %s119 = scalar_lea.vmem %s2, 232
  %s120 = scalar_lea.vmem %s0, 232
  %v121 = vld [vmem:[%s120] sm:$0xff]
  %122 = vst [vmem:[%s119] sm:$0xff] %v121
  %s123 = scalar_lea.vmem %s2, 240
  %s124 = scalar_lea.vmem %s0, 240
  %v125 = vld [vmem:[%s124] sm:$0xff]
  %126 = vst [vmem:[%s123] sm:$0xff] %v125
  %s127 = scalar_lea.vmem %s2, 248
  %s128 = scalar_lea.vmem %s0, 248
  %v129 = vld [vmem:[%s128] sm:$0xff]
  %130 = vst [vmem:[%s127] sm:$0xff] %v129
  %s131 = scalar_lea.vmem %s2, 256
  %s132 = scalar_lea.vmem %s0, 256
  %v133 = vld [vmem:[%s132] sm:$0xff]
  %134 = vst [vmem:[%s131] sm:$0xff] %v133
  %s135 = scalar_lea.vmem %s2, 264
  %s136 = scalar_lea.vmem %s0, 264
  %v137 = vld [vmem:[%s136] sm:$0xff]
  %138 = vst [vmem:[%s135] sm:$0xff] %v137
  %s139 = scalar_lea.vmem %s2, 272
  %s140 = scalar_lea.vmem %s0, 272
  %v141 = vld [vmem:[%s140] sm:$0xff]
  %142 = vst [vmem:[%s139] sm:$0xff] %v141
  %s143 = scalar_lea.vmem %s2, 280
  %s144 = scalar_lea.vmem %s0, 280
  %v145 = vld [vmem:[%s144] sm:$0xff]
  %146 = vst [vmem:[%s143] sm:$0xff] %v145
  %s147 = scalar_lea.vmem %s2, 288
  %s148 = scalar_lea.vmem %s0, 288
  %v149 = vld [vmem:[%s148] sm:$0xff]
  %150 = vst [vmem:[%s147] sm:$0xff] %v149
  %s151 = scalar_lea.vmem %s2, 296
  %s152 = scalar_lea.vmem %s0, 296
  %v153 = vld [vmem:[%s152] sm:$0xff]
  %154 = vst [vmem:[%s151] sm:$0xff] %v153
  %s155 = scalar_lea.vmem %s2, 304
  %s156 = scalar_lea.vmem %s0, 304
  %v157 = vld [vmem:[%s156] sm:$0xff]
  %158 = vst [vmem:[%s155] sm:$0xff] %v157
  %s159 = scalar_lea.vmem %s2, 312
  %s160 = scalar_lea.vmem %s0, 312
  %v161 = vld [vmem:[%s160] sm:$0xff]
  %162 = vst [vmem:[%s159] sm:$0xff] %v161
  %s163 = scalar_lea.vmem %s2, 320
  %s164 = scalar_lea.vmem %s0, 320
  %v165 = vld [vmem:[%s164] sm:$0xff]
  %166 = vst [vmem:[%s163] sm:$0xff] %v165
  %s167 = scalar_lea.vmem %s2, 328
  %s168 = scalar_lea.vmem %s0, 328
  %v169 = vld [vmem:[%s168] sm:$0xff]
  %170 = vst [vmem:[%s167] sm:$0xff] %v169
  %s171 = scalar_lea.vmem %s2, 336
  %s172 = scalar_lea.vmem %s0, 336
  %v173 = vld [vmem:[%s172] sm:$0xff]
  %174 = vst [vmem:[%s171] sm:$0xff] %v173
  %s175 = scalar_lea.vmem %s2, 344
  %s176 = scalar_lea.vmem %s0, 344
  %v177 = vld [vmem:[%s176] sm:$0xff]
  %178 = vst [vmem:[%s175] sm:$0xff] %v177
  %s179 = scalar_lea.vmem %s2, 352
  %s180 = scalar_lea.vmem %s0, 352
  %v181 = vld [vmem:[%s180] sm:$0xff]
  %182 = vst [vmem:[%s179] sm:$0xff] %v181
  %s183 = scalar_lea.vmem %s2, 360
  %s184 = scalar_lea.vmem %s0, 360
  %v185 = vld [vmem:[%s184] sm:$0xff]
  %186 = vst [vmem:[%s183] sm:$0xff] %v185
  %s187 = scalar_lea.vmem %s2, 368
  %s188 = scalar_lea.vmem %s0, 368
  %v189 = vld [vmem:[%s188] sm:$0xff]
  %190 = vst [vmem:[%s187] sm:$0xff] %v189
  %s191 = scalar_lea.vmem %s2, 376
  %s192 = scalar_lea.vmem %s0, 376
  %v193 = vld [vmem:[%s192] sm:$0xff]
  %194 = vst [vmem:[%s191] sm:$0xff] %v193
  %s195 = scalar_lea.vmem %s2, 384
  %s196 = scalar_lea.vmem %s0, 384
  %v197 = vld [vmem:[%s196] sm:$0xff]
  %198 = vst [vmem:[%s195] sm:$0xff] %v197
  %s199 = scalar_lea.vmem %s2, 392
  %s200 = scalar_lea.vmem %s0, 392
  %v201 = vld [vmem:[%s200] sm:$0xff]
  %202 = vst [vmem:[%s199] sm:$0xff] %v201
  %s203 = scalar_lea.vmem %s2, 400
  %s204 = scalar_lea.vmem %s0, 400
  %v205 = vld [vmem:[%s204] sm:$0xff]
  %206 = vst [vmem:[%s203] sm:$0xff] %v205
  %s207 = scalar_lea.vmem %s2, 408
  %s208 = scalar_lea.vmem %s0, 408
  %v209 = vld [vmem:[%s208] sm:$0xff]
  %210 = vst [vmem:[%s207] sm:$0xff] %v209
  %s211 = scalar_lea.vmem %s2, 416
  %s212 = scalar_lea.vmem %s0, 416
  %v213 = vld [vmem:[%s212] sm:$0xff]
  %214 = vst [vmem:[%s211] sm:$0xff] %v213
  %s215 = scalar_lea.vmem %s2, 424
  %s216 = scalar_lea.vmem %s0, 424
  %v217 = vld [vmem:[%s216] sm:$0xff]
  %218 = vst [vmem:[%s215] sm:$0xff] %v217
  %s219 = scalar_lea.vmem %s2, 432
  %s220 = scalar_lea.vmem %s0, 432
  %v221 = vld [vmem:[%s220] sm:$0xff]
  %222 = vst [vmem:[%s219] sm:$0xff] %v221
  %s223 = scalar_lea.vmem %s2, 440
  %s224 = scalar_lea.vmem %s0, 440
  %v225 = vld [vmem:[%s224] sm:$0xff]
  %226 = vst [vmem:[%s223] sm:$0xff] %v225
  %s227 = scalar_lea.vmem %s2, 448
  %s228 = scalar_lea.vmem %s0, 448
  %v229 = vld [vmem:[%s228] sm:$0xff]
  %230 = vst [vmem:[%s227] sm:$0xff] %v229
  %s231 = scalar_lea.vmem %s2, 456
  %s232 = scalar_lea.vmem %s0, 456
  %v233 = vld [vmem:[%s232] sm:$0xff]
  %234 = vst [vmem:[%s231] sm:$0xff] %v233
  %s235 = scalar_lea.vmem %s2, 464
  %s236 = scalar_lea.vmem %s0, 464
  %v237 = vld [vmem:[%s236] sm:$0xff]
  %238 = vst [vmem:[%s235] sm:$0xff] %v237
  %s239 = scalar_lea.vmem %s2, 472
  %s240 = scalar_lea.vmem %s0, 472
  %v241 = vld [vmem:[%s240] sm:$0xff]
  %242 = vst [vmem:[%s239] sm:$0xff] %v241
  %s243 = scalar_lea.vmem %s2, 480
  %s244 = scalar_lea.vmem %s0, 480
  %v245 = vld [vmem:[%s244] sm:$0xff]
  %246 = vst [vmem:[%s243] sm:$0xff] %v245
  %s247 = scalar_lea.vmem %s2, 488
  %s248 = scalar_lea.vmem %s0, 488
  %v249 = vld [vmem:[%s248] sm:$0xff]
  %250 = vst [vmem:[%s247] sm:$0xff] %v249
  %s251 = scalar_lea.vmem %s2, 496
  %s252 = scalar_lea.vmem %s0, 496
  %v253 = vld [vmem:[%s252] sm:$0xff]
  %254 = vst [vmem:[%s251] sm:$0xff] %v253
  %s255 = scalar_lea.vmem %s2, 504
  %s256 = scalar_lea.vmem %s0, 504
  %v257 = vld [vmem:[%s256] sm:$0xff]
  %258 = vst [vmem:[%s255] sm:$0xff] %v257
  %s259 = scalar_lea.vmem %s2, 512
  %s260 = scalar_lea.vmem %s0, 512
  %v261 = vld [vmem:[%s260] sm:$0xff]
  %262 = vst [vmem:[%s259] sm:$0xff] %v261
  %s263 = scalar_lea.vmem %s2, 520
  %s264 = scalar_lea.vmem %s0, 520
  %v265 = vld [vmem:[%s264] sm:$0xff]
  %266 = vst [vmem:[%s263] sm:$0xff] %v265
  %s267 = scalar_lea.vmem %s2, 528
  %s268 = scalar_lea.vmem %s0, 528
  %v269 = vld [vmem:[%s268] sm:$0xff]
  %270 = vst [vmem:[%s267] sm:$0xff] %v269
  %s271 = scalar_lea.vmem %s2, 536
  %s272 = scalar_lea.vmem %s0, 536
  %v273 = vld [vmem:[%s272] sm:$0xff]
  %274 = vst [vmem:[%s271] sm:$0xff] %v273
  %s275 = scalar_lea.vmem %s2, 544
  %s276 = scalar_lea.vmem %s0, 544
  %v277 = vld [vmem:[%s276] sm:$0xff]
  %278 = vst [vmem:[%s275] sm:$0xff] %v277
  %s279 = scalar_lea.vmem %s2, 552
  %s280 = scalar_lea.vmem %s0, 552
  %v281 = vld [vmem:[%s280] sm:$0xff]
  %282 = vst [vmem:[%s279] sm:$0xff] %v281
  %s283 = scalar_lea.vmem %s2, 560
  %s284 = scalar_lea.vmem %s0, 560
  %v285 = vld [vmem:[%s284] sm:$0xff]
  %286 = vst [vmem:[%s283] sm:$0xff] %v285
  %s287 = scalar_lea.vmem %s2, 568
  %s288 = scalar_lea.vmem %s0, 568
  %v289 = vld [vmem:[%s288] sm:$0xff]
  %290 = vst [vmem:[%s287] sm:$0xff] %v289
  %s291 = scalar_lea.vmem %s2, 576
  %s292 = scalar_lea.vmem %s0, 576
  %v293 = vld [vmem:[%s292] sm:$0xff]
  %294 = vst [vmem:[%s291] sm:$0xff] %v293
  %s295 = scalar_lea.vmem %s2, 584
  %s296 = scalar_lea.vmem %s0, 584
  %v297 = vld [vmem:[%s296] sm:$0xff]
  %298 = vst [vmem:[%s295] sm:$0xff] %v297
  %s299 = scalar_lea.vmem %s2, 592
  %s300 = scalar_lea.vmem %s0, 592
  %v301 = vld [vmem:[%s300] sm:$0xff]
  %302 = vst [vmem:[%s299] sm:$0xff] %v301
  %s303 = scalar_lea.vmem %s2, 600
  %s304 = scalar_lea.vmem %s0, 600
  %v305 = vld [vmem:[%s304] sm:$0xff]
  %306 = vst [vmem:[%s303] sm:$0xff] %v305
  %s307 = scalar_lea.vmem %s2, 608
  %s308 = scalar_lea.vmem %s0, 608
  %v309 = vld [vmem:[%s308] sm:$0xff]
  %310 = vst [vmem:[%s307] sm:$0xff] %v309
  %s311 = scalar_lea.vmem %s2, 616
  %s312 = scalar_lea.vmem %s0, 616
  %v313 = vld [vmem:[%s312] sm:$0xff]
  %314 = vst [vmem:[%s311] sm:$0xff] %v313
  %s315 = scalar_lea.vmem %s2, 624
  %s316 = scalar_lea.vmem %s0, 624
  %v317 = vld [vmem:[%s316] sm:$0xff]
  %318 = vst [vmem:[%s315] sm:$0xff] %v317
  %s319 = scalar_lea.vmem %s2, 632
  %s320 = scalar_lea.vmem %s0, 632
  %v321 = vld [vmem:[%s320] sm:$0xff]
  %322 = vst [vmem:[%s319] sm:$0xff] %v321
  %s323 = scalar_lea.vmem %s2, 640
  %s324 = scalar_lea.vmem %s0, 640
  %v325 = vld [vmem:[%s324] sm:$0xff]
  %326 = vst [vmem:[%s323] sm:$0xff] %v325
  %s327 = scalar_lea.vmem %s2, 648
  %s328 = scalar_lea.vmem %s0, 648
  %v329 = vld [vmem:[%s328] sm:$0xff]
  %330 = vst [vmem:[%s327] sm:$0xff] %v329
  %s331 = scalar_lea.vmem %s2, 656
  %s332 = scalar_lea.vmem %s0, 656
  %v333 = vld [vmem:[%s332] sm:$0xff]
  %334 = vst [vmem:[%s331] sm:$0xff] %v333
  %s335 = scalar_lea.vmem %s2, 664
  %s336 = scalar_lea.vmem %s0, 664
  %v337 = vld [vmem:[%s336] sm:$0xff]
  %338 = vst [vmem:[%s335] sm:$0xff] %v337
  %s339 = scalar_lea.vmem %s2, 672
  %s340 = scalar_lea.vmem %s0, 672
  %v341 = vld [vmem:[%s340] sm:$0xff]
  %342 = vst [vmem:[%s339] sm:$0xff] %v341
  %s343 = scalar_lea.vmem %s2, 680
  %s344 = scalar_lea.vmem %s0, 680
  %v345 = vld [vmem:[%s344] sm:$0xff]
  %346 = vst [vmem:[%s343] sm:$0xff] %v345
  %s347 = scalar_lea.vmem %s2, 688
  %s348 = scalar_lea.vmem %s0, 688
  %v349 = vld [vmem:[%s348] sm:$0xff]
  %350 = vst [vmem:[%s347] sm:$0xff] %v349
  %s351 = scalar_lea.vmem %s2, 696
  %s352 = scalar_lea.vmem %s0, 696
  %v353 = vld [vmem:[%s352] sm:$0xff]
  %354 = vst [vmem:[%s351] sm:$0xff] %v353
  %s355 = scalar_lea.vmem %s2, 704
  %s356 = scalar_lea.vmem %s0, 704
  %v357 = vld [vmem:[%s356] sm:$0xff]
  %358 = vst [vmem:[%s355] sm:$0xff] %v357
  %s359 = scalar_lea.vmem %s2, 712
  %s360 = scalar_lea.vmem %s0, 712
  %v361 = vld [vmem:[%s360] sm:$0xff]
  %362 = vst [vmem:[%s359] sm:$0xff] %v361
  %s363 = scalar_lea.vmem %s2, 720
  %s364 = scalar_lea.vmem %s0, 720
  %v365 = vld [vmem:[%s364] sm:$0xff]
  %366 = vst [vmem:[%s363] sm:$0xff] %v365
  %s367 = scalar_lea.vmem %s2, 728
  %s368 = scalar_lea.vmem %s0, 728
  %v369 = vld [vmem:[%s368] sm:$0xff]
  %370 = vst [vmem:[%s367] sm:$0xff] %v369
  %s371 = scalar_lea.vmem %s2, 736
  %s372 = scalar_lea.vmem %s0, 736
  %v373 = vld [vmem:[%s372] sm:$0xff]
  %374 = vst [vmem:[%s371] sm:$0xff] %v373
  %s375 = scalar_lea.vmem %s2, 744
  %s376 = scalar_lea.vmem %s0, 744
  %v377 = vld [vmem:[%s376] sm:$0xff]
  %378 = vst [vmem:[%s375] sm:$0xff] %v377
  %s379 = scalar_lea.vmem %s2, 752
  %s380 = scalar_lea.vmem %s0, 752
  %v381 = vld [vmem:[%s380] sm:$0xff]
  %382 = vst [vmem:[%s379] sm:$0xff] %v381
  %s383 = scalar_lea.vmem %s2, 760
  %s384 = scalar_lea.vmem %s0, 760
  %v385 = vld [vmem:[%s384] sm:$0xff]
  %386 = vst [vmem:[%s383] sm:$0xff] %v385
  %s387 = scalar_lea.vmem %s2, 768
  %s388 = scalar_lea.vmem %s0, 768
  %v389 = vld [vmem:[%s388] sm:$0xff]
  %390 = vst [vmem:[%s387] sm:$0xff] %v389
  %s391 = scalar_lea.vmem %s2, 776
  %s392 = scalar_lea.vmem %s0, 776
  %v393 = vld [vmem:[%s392] sm:$0xff]
  %394 = vst [vmem:[%s391] sm:$0xff] %v393
  %s395 = scalar_lea.vmem %s2, 784
  %s396 = scalar_lea.vmem %s0, 784
  %v397 = vld [vmem:[%s396] sm:$0xff]
  %398 = vst [vmem:[%s395] sm:$0xff] %v397
  %s399 = scalar_lea.vmem %s2, 792
  %s400 = scalar_lea.vmem %s0, 792
  %v401 = vld [vmem:[%s400] sm:$0xff]
  %402 = vst [vmem:[%s399] sm:$0xff] %v401
  %s403 = scalar_lea.vmem %s2, 800
  %s404 = scalar_lea.vmem %s0, 800
  %v405 = vld [vmem:[%s404] sm:$0xff]
  %406 = vst [vmem:[%s403] sm:$0xff] %v405
  %s407 = scalar_lea.vmem %s2, 808
  %s408 = scalar_lea.vmem %s0, 808
  %v409 = vld [vmem:[%s408] sm:$0xff]
  %410 = vst [vmem:[%s407] sm:$0xff] %v409
  %s411 = scalar_lea.vmem %s2, 816
  %s412 = scalar_lea.vmem %s0, 816
  %v413 = vld [vmem:[%s412] sm:$0xff]
  %414 = vst [vmem:[%s411] sm:$0xff] %v413
  %s415 = scalar_lea.vmem %s2, 824
  %s416 = scalar_lea.vmem %s0, 824
  %v417 = vld [vmem:[%s416] sm:$0xff]
  %418 = vst [vmem:[%s415] sm:$0xff] %v417
  %s419 = scalar_lea.vmem %s2, 832
  %s420 = scalar_lea.vmem %s0, 832
  %v421 = vld [vmem:[%s420] sm:$0xff]
  %422 = vst [vmem:[%s419] sm:$0xff] %v421
  %s423 = scalar_lea.vmem %s2, 840
  %s424 = scalar_lea.vmem %s0, 840
  %v425 = vld [vmem:[%s424] sm:$0xff]
  %426 = vst [vmem:[%s423] sm:$0xff] %v425
  %s427 = scalar_lea.vmem %s2, 848
  %s428 = scalar_lea.vmem %s0, 848
  %v429 = vld [vmem:[%s428] sm:$0xff]
  %430 = vst [vmem:[%s427] sm:$0xff] %v429
  %s431 = scalar_lea.vmem %s2, 856
  %s432 = scalar_lea.vmem %s0, 856
  %v433 = vld [vmem:[%s432] sm:$0xff]
  %434 = vst [vmem:[%s431] sm:$0xff] %v433
  %s435 = scalar_lea.vmem %s2, 864
  %s436 = scalar_lea.vmem %s0, 864
  %v437 = vld [vmem:[%s436] sm:$0xff]
  %438 = vst [vmem:[%s435] sm:$0xff] %v437
  %s439 = scalar_lea.vmem %s2, 872
  %s440 = scalar_lea.vmem %s0, 872
  %v441 = vld [vmem:[%s440] sm:$0xff]
  %442 = vst [vmem:[%s439] sm:$0xff] %v441
  %s443 = scalar_lea.vmem %s2, 880
  %s444 = scalar_lea.vmem %s0, 880
  %v445 = vld [vmem:[%s444] sm:$0xff]
  %446 = vst [vmem:[%s443] sm:$0xff] %v445
  %s447 = scalar_lea.vmem %s2, 888
  %s448 = scalar_lea.vmem %s0, 888
  %v449 = vld [vmem:[%s448] sm:$0xff]
  %450 = vst [vmem:[%s447] sm:$0xff] %v449
  %s451 = scalar_lea.vmem %s2, 896
  %s452 = scalar_lea.vmem %s0, 896
  %v453 = vld [vmem:[%s452] sm:$0xff]
  %454 = vst [vmem:[%s451] sm:$0xff] %v453
  %s455 = scalar_lea.vmem %s2, 904
  %s456 = scalar_lea.vmem %s0, 904
  %v457 = vld [vmem:[%s456] sm:$0xff]
  %458 = vst [vmem:[%s455] sm:$0xff] %v457
  %s459 = scalar_lea.vmem %s2, 912
  %s460 = scalar_lea.vmem %s0, 912
  %v461 = vld [vmem:[%s460] sm:$0xff]
  %462 = vst [vmem:[%s459] sm:$0xff] %v461
  %s463 = scalar_lea.vmem %s2, 920
  %s464 = scalar_lea.vmem %s0, 920
  %v465 = vld [vmem:[%s464] sm:$0xff]
  %466 = vst [vmem:[%s463] sm:$0xff] %v465
  %s467 = scalar_lea.vmem %s2, 928
  %s468 = scalar_lea.vmem %s0, 928
  %v469 = vld [vmem:[%s468] sm:$0xff]
  %470 = vst [vmem:[%s467] sm:$0xff] %v469
  %s471 = scalar_lea.vmem %s2, 936
  %s472 = scalar_lea.vmem %s0, 936
  %v473 = vld [vmem:[%s472] sm:$0xff]
  %474 = vst [vmem:[%s471] sm:$0xff] %v473
  %s475 = scalar_lea.vmem %s2, 944
  %s476 = scalar_lea.vmem %s0, 944
  %v477 = vld [vmem:[%s476] sm:$0xff]
  %478 = vst [vmem:[%s475] sm:$0xff] %v477
  %s479 = scalar_lea.vmem %s2, 952
  %s480 = scalar_lea.vmem %s0, 952
  %v481 = vld [vmem:[%s480] sm:$0xff]
  %482 = vst [vmem:[%s479] sm:$0xff] %v481
  %s483 = scalar_lea.vmem %s2, 960
  %s484 = scalar_lea.vmem %s0, 960
  %v485 = vld [vmem:[%s484] sm:$0xff]
  %486 = vst [vmem:[%s483] sm:$0xff] %v485
  %s487 = scalar_lea.vmem %s2, 968
  %s488 = scalar_lea.vmem %s0, 968
  %v489 = vld [vmem:[%s488] sm:$0xff]
  %490 = vst [vmem:[%s487] sm:$0xff] %v489
  %s491 = scalar_lea.vmem %s2, 976
  %s492 = scalar_lea.vmem %s0, 976
  %v493 = vld [vmem:[%s492] sm:$0xff]
  %494 = vst [vmem:[%s491] sm:$0xff] %v493
  %s495 = scalar_lea.vmem %s2, 984
  %s496 = scalar_lea.vmem %s0, 984
  %v497 = vld [vmem:[%s496] sm:$0xff]
  %498 = vst [vmem:[%s495] sm:$0xff] %v497
  %s499 = scalar_lea.vmem %s2, 992
  %s500 = scalar_lea.vmem %s0, 992
  %v501 = vld [vmem:[%s500] sm:$0xff]
  %502 = vst [vmem:[%s499] sm:$0xff] %v501
  %s503 = scalar_lea.vmem %s2, 1000
  %s504 = scalar_lea.vmem %s0, 1000
  %v505 = vld [vmem:[%s504] sm:$0xff]
  %506 = vst [vmem:[%s503] sm:$0xff] %v505
  %s507 = scalar_lea.vmem %s2, 1008
  %s508 = scalar_lea.vmem %s0, 1008
  %v509 = vld [vmem:[%s508] sm:$0xff]
  %510 = vst [vmem:[%s507] sm:$0xff] %v509
  %s511 = scalar_lea.vmem %s2, 1016
  %s512 = scalar_lea.vmem %s0, 1016
  %v513 = vld [vmem:[%s512] sm:$0xff]
  %514 = vst [vmem:[%s511] sm:$0xff] %v513
  %s515 = scalar_lea.vmem %s2, 1024
  %s516 = scalar_lea.vmem %s0, 1024
  %v517 = vld [vmem:[%s516] sm:$0xff]
  %518 = vst [vmem:[%s515] sm:$0xff] %v517
  %s519 = scalar_lea.vmem %s2, 1032
  %s520 = scalar_lea.vmem %s0, 1032
  %v521 = vld [vmem:[%s520] sm:$0xff]
  %522 = vst [vmem:[%s519] sm:$0xff] %v521
  %s523 = scalar_lea.vmem %s2, 1040
  %s524 = scalar_lea.vmem %s0, 1040
  %v525 = vld [vmem:[%s524] sm:$0xff]
  %526 = vst [vmem:[%s523] sm:$0xff] %v525
  %s527 = scalar_lea.vmem %s2, 1048
  %s528 = scalar_lea.vmem %s0, 1048
  %v529 = vld [vmem:[%s528] sm:$0xff]
  %530 = vst [vmem:[%s527] sm:$0xff] %v529
  %s531 = scalar_lea.vmem %s2, 1056
  %s532 = scalar_lea.vmem %s0, 1056
  %v533 = vld [vmem:[%s532] sm:$0xff]
  %534 = vst [vmem:[%s531] sm:$0xff] %v533
  %s535 = scalar_lea.vmem %s2, 1064
  %s536 = scalar_lea.vmem %s0, 1064
  %v537 = vld [vmem:[%s536] sm:$0xff]
  %538 = vst [vmem:[%s535] sm:$0xff] %v537
  %s539 = scalar_lea.vmem %s2, 1072
  %s540 = scalar_lea.vmem %s0, 1072
  %v541 = vld [vmem:[%s540] sm:$0xff]
  %542 = vst [vmem:[%s539] sm:$0xff] %v541
  %s543 = scalar_lea.vmem %s2, 1080
  %s544 = scalar_lea.vmem %s0, 1080
  %v545 = vld [vmem:[%s544] sm:$0xff]
  %546 = vst [vmem:[%s543] sm:$0xff] %v545
  %s547 = scalar_lea.vmem %s2, 1088
  %s548 = scalar_lea.vmem %s0, 1088
  %v549 = vld [vmem:[%s548] sm:$0xff]
  %550 = vst [vmem:[%s547] sm:$0xff] %v549
  %s551 = scalar_lea.vmem %s2, 1096
  %s552 = scalar_lea.vmem %s0, 1096
  %v553 = vld [vmem:[%s552] sm:$0xff]
  %554 = vst [vmem:[%s551] sm:$0xff] %v553
  %s555 = scalar_lea.vmem %s2, 1104
  %s556 = scalar_lea.vmem %s0, 1104
  %v557 = vld [vmem:[%s556] sm:$0xff]
  %558 = vst [vmem:[%s555] sm:$0xff] %v557
  %s559 = scalar_lea.vmem %s2, 1112
  %s560 = scalar_lea.vmem %s0, 1112
  %v561 = vld [vmem:[%s560] sm:$0xff]
  %562 = vst [vmem:[%s559] sm:$0xff] %v561
  %s563 = scalar_lea.vmem %s2, 1120
  %s564 = scalar_lea.vmem %s0, 1120
  %v565 = vld [vmem:[%s564] sm:$0xff]
  %566 = vst [vmem:[%s563] sm:$0xff] %v565
  %s567 = scalar_lea.vmem %s2, 1128
  %s568 = scalar_lea.vmem %s0, 1128
  %v569 = vld [vmem:[%s568] sm:$0xff]
  %570 = vst [vmem:[%s567] sm:$0xff] %v569
  %s571 = scalar_lea.vmem %s2, 1136
  %s572 = scalar_lea.vmem %s0, 1136
  %v573 = vld [vmem:[%s572] sm:$0xff]
  %574 = vst [vmem:[%s571] sm:$0xff] %v573
  %s575 = scalar_lea.vmem %s2, 1144
  %s576 = scalar_lea.vmem %s0, 1144
  %v577 = vld [vmem:[%s576] sm:$0xff]
  %578 = vst [vmem:[%s575] sm:$0xff] %v577
  %s579 = scalar_lea.vmem %s2, 1152
  %s580 = scalar_lea.vmem %s0, 1152
  %v581 = vld [vmem:[%s580] sm:$0xff]
  %582 = vst [vmem:[%s579] sm:$0xff] %v581
  %s583 = scalar_lea.vmem %s2, 1160
  %s584 = scalar_lea.vmem %s0, 1160
  %v585 = vld [vmem:[%s584] sm:$0xff]
  %586 = vst [vmem:[%s583] sm:$0xff] %v585
  %s587 = scalar_lea.vmem %s2, 1168
  %s588 = scalar_lea.vmem %s0, 1168
  %v589 = vld [vmem:[%s588] sm:$0xff]
  %590 = vst [vmem:[%s587] sm:$0xff] %v589
  %s591 = scalar_lea.vmem %s2, 1176
  %s592 = scalar_lea.vmem %s0, 1176
  %v593 = vld [vmem:[%s592] sm:$0xff]
  %594 = vst [vmem:[%s591] sm:$0xff] %v593
  %s595 = scalar_lea.vmem %s2, 1184
  %s596 = scalar_lea.vmem %s0, 1184
  %v597 = vld [vmem:[%s596] sm:$0xff]
  %598 = vst [vmem:[%s595] sm:$0xff] %v597
  %s599 = scalar_lea.vmem %s2, 1192
  %s600 = scalar_lea.vmem %s0, 1192
  %v601 = vld [vmem:[%s600] sm:$0xff]
  %602 = vst [vmem:[%s599] sm:$0xff] %v601
  %s603 = scalar_lea.vmem %s2, 1200
  %s604 = scalar_lea.vmem %s0, 1200
  %v605 = vld [vmem:[%s604] sm:$0xff]
  %606 = vst [vmem:[%s603] sm:$0xff] %v605
  %s607 = scalar_lea.vmem %s2, 1208
  %s608 = scalar_lea.vmem %s0, 1208
  %v609 = vld [vmem:[%s608] sm:$0xff]
  %610 = vst [vmem:[%s607] sm:$0xff] %v609
  %s611 = scalar_lea.vmem %s2, 1216
  %s612 = scalar_lea.vmem %s0, 1216
  %v613 = vld [vmem:[%s612] sm:$0xff]
  %614 = vst [vmem:[%s611] sm:$0xff] %v613
  %s615 = scalar_lea.vmem %s2, 1224
  %s616 = scalar_lea.vmem %s0, 1224
  %v617 = vld [vmem:[%s616] sm:$0xff]
  %618 = vst [vmem:[%s615] sm:$0xff] %v617
  %s619 = scalar_lea.vmem %s2, 1232
  %s620 = scalar_lea.vmem %s0, 1232
  %v621 = vld [vmem:[%s620] sm:$0xff]
  %622 = vst [vmem:[%s619] sm:$0xff] %v621
  %s623 = scalar_lea.vmem %s2, 1240
  %s624 = scalar_lea.vmem %s0, 1240
  %v625 = vld [vmem:[%s624] sm:$0xff]
  %626 = vst [vmem:[%s623] sm:$0xff] %v625
  %s627 = scalar_lea.vmem %s2, 1248
  %s628 = scalar_lea.vmem %s0, 1248
  %v629 = vld [vmem:[%s628] sm:$0xff]
  %630 = vst [vmem:[%s627] sm:$0xff] %v629
  %s631 = scalar_lea.vmem %s2, 1256
  %s632 = scalar_lea.vmem %s0, 1256
  %v633 = vld [vmem:[%s632] sm:$0xff]
  %634 = vst [vmem:[%s631] sm:$0xff] %v633
  %s635 = scalar_lea.vmem %s2, 1264
  %s636 = scalar_lea.vmem %s0, 1264
  %v637 = vld [vmem:[%s636] sm:$0xff]
  %638 = vst [vmem:[%s635] sm:$0xff] %v637
  %s639 = scalar_lea.vmem %s2, 1272
  %s640 = scalar_lea.vmem %s0, 1272
  %v641 = vld [vmem:[%s640] sm:$0xff]
  %642 = vst [vmem:[%s639] sm:$0xff] %v641
  %s643 = scalar_lea.vmem %s2, 1280
  %s644 = scalar_lea.vmem %s0, 1280
  %v645 = vld [vmem:[%s644] sm:$0xff]
  %646 = vst [vmem:[%s643] sm:$0xff] %v645
  %s647 = scalar_lea.vmem %s2, 1288
  %s648 = scalar_lea.vmem %s0, 1288
  %v649 = vld [vmem:[%s648] sm:$0xff]
  %650 = vst [vmem:[%s647] sm:$0xff] %v649
  %s651 = scalar_lea.vmem %s2, 1296
  %s652 = scalar_lea.vmem %s0, 1296
  %v653 = vld [vmem:[%s652] sm:$0xff]
  %654 = vst [vmem:[%s651] sm:$0xff] %v653
  %s655 = scalar_lea.vmem %s2, 1304
  %s656 = scalar_lea.vmem %s0, 1304
  %v657 = vld [vmem:[%s656] sm:$0xff]
  %658 = vst [vmem:[%s655] sm:$0xff] %v657
  %s659 = scalar_lea.vmem %s2, 1312
  %s660 = scalar_lea.vmem %s0, 1312
  %v661 = vld [vmem:[%s660] sm:$0xff]
  %662 = vst [vmem:[%s659] sm:$0xff] %v661
  %s663 = scalar_lea.vmem %s2, 1320
  %s664 = scalar_lea.vmem %s0, 1320
  %v665 = vld [vmem:[%s664] sm:$0xff]
  %666 = vst [vmem:[%s663] sm:$0xff] %v665
  %s667 = scalar_lea.vmem %s2, 1328
  %s668 = scalar_lea.vmem %s0, 1328
  %v669 = vld [vmem:[%s668] sm:$0xff]
  %670 = vst [vmem:[%s667] sm:$0xff] %v669
  %s671 = scalar_lea.vmem %s2, 1336
  %s672 = scalar_lea.vmem %s0, 1336
  %v673 = vld [vmem:[%s672] sm:$0xff]
  %674 = vst [vmem:[%s671] sm:$0xff] %v673
  %s675 = scalar_lea.vmem %s2, 1344
  %s676 = scalar_lea.vmem %s0, 1344
  %v677 = vld [vmem:[%s676] sm:$0xff]
  %678 = vst [vmem:[%s675] sm:$0xff] %v677
  %s679 = scalar_lea.vmem %s2, 1352
  %s680 = scalar_lea.vmem %s0, 1352
  %v681 = vld [vmem:[%s680] sm:$0xff]
  %682 = vst [vmem:[%s679] sm:$0xff] %v681
  %s683 = scalar_lea.vmem %s2, 1360
  %s684 = scalar_lea.vmem %s0, 1360
  %v685 = vld [vmem:[%s684] sm:$0xff]
  %686 = vst [vmem:[%s683] sm:$0xff] %v685
  %s687 = scalar_lea.vmem %s2, 1368
  %s688 = scalar_lea.vmem %s0, 1368
  %v689 = vld [vmem:[%s688] sm:$0xff]
  %690 = vst [vmem:[%s687] sm:$0xff] %v689
  %s691 = scalar_lea.vmem %s2, 1376
  %s692 = scalar_lea.vmem %s0, 1376
  %v693 = vld [vmem:[%s692] sm:$0xff]
  %694 = vst [vmem:[%s691] sm:$0xff] %v693
  %s695 = scalar_lea.vmem %s2, 1384
  %s696 = scalar_lea.vmem %s0, 1384
  %v697 = vld [vmem:[%s696] sm:$0xff]
  %698 = vst [vmem:[%s695] sm:$0xff] %v697
  %s699 = scalar_lea.vmem %s2, 1392
  %s700 = scalar_lea.vmem %s0, 1392
  %v701 = vld [vmem:[%s700] sm:$0xff]
  %702 = vst [vmem:[%s699] sm:$0xff] %v701
  %s703 = scalar_lea.vmem %s2, 1400
  %s704 = scalar_lea.vmem %s0, 1400
  %v705 = vld [vmem:[%s704] sm:$0xff]
  %706 = vst [vmem:[%s703] sm:$0xff] %v705
  %s707 = scalar_lea.vmem %s2, 1408
  %s708 = scalar_lea.vmem %s0, 1408
  %v709 = vld [vmem:[%s708] sm:$0xff]
  %710 = vst [vmem:[%s707] sm:$0xff] %v709
  %s711 = scalar_lea.vmem %s2, 1416
  %s712 = scalar_lea.vmem %s0, 1416
  %v713 = vld [vmem:[%s712] sm:$0xff]
  %714 = vst [vmem:[%s711] sm:$0xff] %v713
  %s715 = scalar_lea.vmem %s2, 1424
  %s716 = scalar_lea.vmem %s0, 1424
  %v717 = vld [vmem:[%s716] sm:$0xff]
  %718 = vst [vmem:[%s715] sm:$0xff] %v717
  %s719 = scalar_lea.vmem %s2, 1432
  %s720 = scalar_lea.vmem %s0, 1432
  %v721 = vld [vmem:[%s720] sm:$0xff]
  %722 = vst [vmem:[%s719] sm:$0xff] %v721
  %s723 = scalar_lea.vmem %s2, 1440
  %s724 = scalar_lea.vmem %s0, 1440
  %v725 = vld [vmem:[%s724] sm:$0xff]
  %726 = vst [vmem:[%s723] sm:$0xff] %v725
  %s727 = scalar_lea.vmem %s2, 1448
  %s728 = scalar_lea.vmem %s0, 1448
  %v729 = vld [vmem:[%s728] sm:$0xff]
  %730 = vst [vmem:[%s727] sm:$0xff] %v729
  %s731 = scalar_lea.vmem %s2, 1456
  %s732 = scalar_lea.vmem %s0, 1456
  %v733 = vld [vmem:[%s732] sm:$0xff]
  %734 = vst [vmem:[%s731] sm:$0xff] %v733
  %s735 = scalar_lea.vmem %s2, 1464
  %s736 = scalar_lea.vmem %s0, 1464
  %v737 = vld [vmem:[%s736] sm:$0xff]
  %738 = vst [vmem:[%s735] sm:$0xff] %v737
  %s739 = scalar_lea.vmem %s2, 1472
  %s740 = scalar_lea.vmem %s0, 1472
  %v741 = vld [vmem:[%s740] sm:$0xff]
  %742 = vst [vmem:[%s739] sm:$0xff] %v741
  %s743 = scalar_lea.vmem %s2, 1480
  %s744 = scalar_lea.vmem %s0, 1480
  %v745 = vld [vmem:[%s744] sm:$0xff]
  %746 = vst [vmem:[%s743] sm:$0xff] %v745
  %s747 = scalar_lea.vmem %s2, 1488
  %s748 = scalar_lea.vmem %s0, 1488
  %v749 = vld [vmem:[%s748] sm:$0xff]
  %750 = vst [vmem:[%s747] sm:$0xff] %v749
  %s751 = scalar_lea.vmem %s2, 1496
  %s752 = scalar_lea.vmem %s0, 1496
  %v753 = vld [vmem:[%s752] sm:$0xff]
  %754 = vst [vmem:[%s751] sm:$0xff] %v753
  %s755 = scalar_lea.vmem %s2, 1504
  %s756 = scalar_lea.vmem %s0, 1504
  %v757 = vld [vmem:[%s756] sm:$0xff]
  %758 = vst [vmem:[%s755] sm:$0xff] %v757
  %s759 = scalar_lea.vmem %s2, 1512
  %s760 = scalar_lea.vmem %s0, 1512
  %v761 = vld [vmem:[%s760] sm:$0xff]
  %762 = vst [vmem:[%s759] sm:$0xff] %v761
  %s763 = scalar_lea.vmem %s2, 1520
  %s764 = scalar_lea.vmem %s0, 1520
  %v765 = vld [vmem:[%s764] sm:$0xff]
  %766 = vst [vmem:[%s763] sm:$0xff] %v765
  %s767 = scalar_lea.vmem %s2, 1528
  %s768 = scalar_lea.vmem %s0, 1528
  %v769 = vld [vmem:[%s768] sm:$0xff]
  %770 = vst [vmem:[%s767] sm:$0xff] %v769
  %s771 = scalar_lea.vmem %s2, 1536
  %s772 = scalar_lea.vmem %s0, 1536
  %v773 = vld [vmem:[%s772] sm:$0xff]
  %774 = vst [vmem:[%s771] sm:$0xff] %v773
  %s775 = scalar_lea.vmem %s2, 1544
  %s776 = scalar_lea.vmem %s0, 1544
  %v777 = vld [vmem:[%s776] sm:$0xff]
  %778 = vst [vmem:[%s775] sm:$0xff] %v777
  %s779 = scalar_lea.vmem %s2, 1552
  %s780 = scalar_lea.vmem %s0, 1552
  %v781 = vld [vmem:[%s780] sm:$0xff]
  %782 = vst [vmem:[%s779] sm:$0xff] %v781
  %s783 = scalar_lea.vmem %s2, 1560
  %s784 = scalar_lea.vmem %s0, 1560
  %v785 = vld [vmem:[%s784] sm:$0xff]
  %786 = vst [vmem:[%s783] sm:$0xff] %v785
  %s787 = scalar_lea.vmem %s2, 1568
  %s788 = scalar_lea.vmem %s0, 1568
  %v789 = vld [vmem:[%s788] sm:$0xff]
  %790 = vst [vmem:[%s787] sm:$0xff] %v789
  %s791 = scalar_lea.vmem %s2, 1576
  %s792 = scalar_lea.vmem %s0, 1576
  %v793 = vld [vmem:[%s792] sm:$0xff]
  %794 = vst [vmem:[%s791] sm:$0xff] %v793
  %s795 = scalar_lea.vmem %s2, 1584
  %s796 = scalar_lea.vmem %s0, 1584
  %v797 = vld [vmem:[%s796] sm:$0xff]
  %798 = vst [vmem:[%s795] sm:$0xff] %v797
  %s799 = scalar_lea.vmem %s2, 1592
  %s800 = scalar_lea.vmem %s0, 1592
  %v801 = vld [vmem:[%s800] sm:$0xff]
  %802 = vst [vmem:[%s799] sm:$0xff] %v801
  %s803 = scalar_lea.vmem %s2, 1600
  %s804 = scalar_lea.vmem %s0, 1600
  %v805 = vld [vmem:[%s804] sm:$0xff]
  %806 = vst [vmem:[%s803] sm:$0xff] %v805
  %s807 = scalar_lea.vmem %s2, 1608
  %s808 = scalar_lea.vmem %s0, 1608
  %v809 = vld [vmem:[%s808] sm:$0xff]
  %810 = vst [vmem:[%s807] sm:$0xff] %v809
  %s811 = scalar_lea.vmem %s2, 1616
  %s812 = scalar_lea.vmem %s0, 1616
  %v813 = vld [vmem:[%s812] sm:$0xff]
  %814 = vst [vmem:[%s811] sm:$0xff] %v813
  %s815 = scalar_lea.vmem %s2, 1624
  %s816 = scalar_lea.vmem %s0, 1624
  %v817 = vld [vmem:[%s816] sm:$0xff]
  %818 = vst [vmem:[%s815] sm:$0xff] %v817
  %s819 = scalar_lea.vmem %s2, 1632
  %s820 = scalar_lea.vmem %s0, 1632
  %v821 = vld [vmem:[%s820] sm:$0xff]
  %822 = vst [vmem:[%s819] sm:$0xff] %v821
  %s823 = scalar_lea.vmem %s2, 1640
  %s824 = scalar_lea.vmem %s0, 1640
  %v825 = vld [vmem:[%s824] sm:$0xff]
  %826 = vst [vmem:[%s823] sm:$0xff] %v825
  %s827 = scalar_lea.vmem %s2, 1648
  %s828 = scalar_lea.vmem %s0, 1648
  %v829 = vld [vmem:[%s828] sm:$0xff]
  %830 = vst [vmem:[%s827] sm:$0xff] %v829
  %s831 = scalar_lea.vmem %s2, 1656
  %s832 = scalar_lea.vmem %s0, 1656
  %v833 = vld [vmem:[%s832] sm:$0xff]
  %834 = vst [vmem:[%s831] sm:$0xff] %v833
  %s835 = scalar_lea.vmem %s2, 1664
  %s836 = scalar_lea.vmem %s0, 1664
  %v837 = vld [vmem:[%s836] sm:$0xff]
  %838 = vst [vmem:[%s835] sm:$0xff] %v837
  %s839 = scalar_lea.vmem %s2, 1672
  %s840 = scalar_lea.vmem %s0, 1672
  %v841 = vld [vmem:[%s840] sm:$0xff]
  %842 = vst [vmem:[%s839] sm:$0xff] %v841
  %s843 = scalar_lea.vmem %s2, 1680
  %s844 = scalar_lea.vmem %s0, 1680
  %v845 = vld [vmem:[%s844] sm:$0xff]
  %846 = vst [vmem:[%s843] sm:$0xff] %v845
  %s847 = scalar_lea.vmem %s2, 1688
  %s848 = scalar_lea.vmem %s0, 1688
  %v849 = vld [vmem:[%s848] sm:$0xff]
  %850 = vst [vmem:[%s847] sm:$0xff] %v849
  %s851 = scalar_lea.vmem %s2, 1696
  %s852 = scalar_lea.vmem %s0, 1696
  %v853 = vld [vmem:[%s852] sm:$0xff]
  %854 = vst [vmem:[%s851] sm:$0xff] %v853
  %s855 = scalar_lea.vmem %s2, 1704
  %s856 = scalar_lea.vmem %s0, 1704
  %v857 = vld [vmem:[%s856] sm:$0xff]
  %858 = vst [vmem:[%s855] sm:$0xff] %v857
  %s859 = scalar_lea.vmem %s2, 1712
  %s860 = scalar_lea.vmem %s0, 1712
  %v861 = vld [vmem:[%s860] sm:$0xff]
  %862 = vst [vmem:[%s859] sm:$0xff] %v861
  %s863 = scalar_lea.vmem %s2, 1720
  %s864 = scalar_lea.vmem %s0, 1720
  %v865 = vld [vmem:[%s864] sm:$0xff]
  %866 = vst [vmem:[%s863] sm:$0xff] %v865
  %s867 = scalar_lea.vmem %s2, 1728
  %s868 = scalar_lea.vmem %s0, 1728
  %v869 = vld [vmem:[%s868] sm:$0xff]
  %870 = vst [vmem:[%s867] sm:$0xff] %v869
  %s871 = scalar_lea.vmem %s2, 1736
  %s872 = scalar_lea.vmem %s0, 1736
  %v873 = vld [vmem:[%s872] sm:$0xff]
  %874 = vst [vmem:[%s871] sm:$0xff] %v873
  %s875 = scalar_lea.vmem %s2, 1744
  %s876 = scalar_lea.vmem %s0, 1744
  %v877 = vld [vmem:[%s876] sm:$0xff]
  %878 = vst [vmem:[%s875] sm:$0xff] %v877
  %s879 = scalar_lea.vmem %s2, 1752
  %s880 = scalar_lea.vmem %s0, 1752
  %v881 = vld [vmem:[%s880] sm:$0xff]
  %882 = vst [vmem:[%s879] sm:$0xff] %v881
  %s883 = scalar_lea.vmem %s2, 1760
  %s884 = scalar_lea.vmem %s0, 1760
  %v885 = vld [vmem:[%s884] sm:$0xff]
  %886 = vst [vmem:[%s883] sm:$0xff] %v885
  %s887 = scalar_lea.vmem %s2, 1768
  %s888 = scalar_lea.vmem %s0, 1768
  %v889 = vld [vmem:[%s888] sm:$0xff]
  %890 = vst [vmem:[%s887] sm:$0xff] %v889
  %s891 = scalar_lea.vmem %s2, 1776
  %s892 = scalar_lea.vmem %s0, 1776
  %v893 = vld [vmem:[%s892] sm:$0xff]
  %894 = vst [vmem:[%s891] sm:$0xff] %v893
  %s895 = scalar_lea.vmem %s2, 1784
  %s896 = scalar_lea.vmem %s0, 1784
  %v897 = vld [vmem:[%s896] sm:$0xff]
  %898 = vst [vmem:[%s895] sm:$0xff] %v897
  %s899 = scalar_lea.vmem %s2, 1792
  %s900 = scalar_lea.vmem %s0, 1792
  %v901 = vld [vmem:[%s900] sm:$0xff]
  %902 = vst [vmem:[%s899] sm:$0xff] %v901
  %s903 = scalar_lea.vmem %s2, 1800
  %s904 = scalar_lea.vmem %s0, 1800
  %v905 = vld [vmem:[%s904] sm:$0xff]
  %906 = vst [vmem:[%s903] sm:$0xff] %v905
  %s907 = scalar_lea.vmem %s2, 1808
  %s908 = scalar_lea.vmem %s0, 1808
  %v909 = vld [vmem:[%s908] sm:$0xff]
  %910 = vst [vmem:[%s907] sm:$0xff] %v909
  %s911 = scalar_lea.vmem %s2, 1816
  %s912 = scalar_lea.vmem %s0, 1816
  %v913 = vld [vmem:[%s912] sm:$0xff]
  %914 = vst [vmem:[%s911] sm:$0xff] %v913
  %s915 = scalar_lea.vmem %s2, 1824
  %s916 = scalar_lea.vmem %s0, 1824
  %v917 = vld [vmem:[%s916] sm:$0xff]
  %918 = vst [vmem:[%s915] sm:$0xff] %v917
  %s919 = scalar_lea.vmem %s2, 1832
  %s920 = scalar_lea.vmem %s0, 1832
  %v921 = vld [vmem:[%s920] sm:$0xff]
  %922 = vst [vmem:[%s919] sm:$0xff] %v921
  %s923 = scalar_lea.vmem %s2, 1840
  %s924 = scalar_lea.vmem %s0, 1840
  %v925 = vld [vmem:[%s924] sm:$0xff]
  %926 = vst [vmem:[%s923] sm:$0xff] %v925
  %s927 = scalar_lea.vmem %s2, 1848
  %s928 = scalar_lea.vmem %s0, 1848
  %v929 = vld [vmem:[%s928] sm:$0xff]
  %930 = vst [vmem:[%s927] sm:$0xff] %v929
  %s931 = scalar_lea.vmem %s2, 1856
  %s932 = scalar_lea.vmem %s0, 1856
  %v933 = vld [vmem:[%s932] sm:$0xff]
  %934 = vst [vmem:[%s931] sm:$0xff] %v933
  %s935 = scalar_lea.vmem %s2, 1864
  %s936 = scalar_lea.vmem %s0, 1864
  %v937 = vld [vmem:[%s936] sm:$0xff]
  %938 = vst [vmem:[%s935] sm:$0xff] %v937
  %s939 = scalar_lea.vmem %s2, 1872
  %s940 = scalar_lea.vmem %s0, 1872
  %v941 = vld [vmem:[%s940] sm:$0xff]
  %942 = vst [vmem:[%s939] sm:$0xff] %v941
  %s943 = scalar_lea.vmem %s2, 1880
  %s944 = scalar_lea.vmem %s0, 1880
  %v945 = vld [vmem:[%s944] sm:$0xff]
  %946 = vst [vmem:[%s943] sm:$0xff] %v945
  %s947 = scalar_lea.vmem %s2, 1888
  %s948 = scalar_lea.vmem %s0, 1888
  %v949 = vld [vmem:[%s948] sm:$0xff]
  %950 = vst [vmem:[%s947] sm:$0xff] %v949
  %s951 = scalar_lea.vmem %s2, 1896
  %s952 = scalar_lea.vmem %s0, 1896
  %v953 = vld [vmem:[%s952] sm:$0xff]
  %954 = vst [vmem:[%s951] sm:$0xff] %v953
  %s955 = scalar_lea.vmem %s2, 1904
  %s956 = scalar_lea.vmem %s0, 1904
  %v957 = vld [vmem:[%s956] sm:$0xff]
  %958 = vst [vmem:[%s955] sm:$0xff] %v957
  %s959 = scalar_lea.vmem %s2, 1912
  %s960 = scalar_lea.vmem %s0, 1912
  %v961 = vld [vmem:[%s960] sm:$0xff]
  %962 = vst [vmem:[%s959] sm:$0xff] %v961
  %s963 = scalar_lea.vmem %s2, 1920
  %s964 = scalar_lea.vmem %s0, 1920
  %v965 = vld [vmem:[%s964] sm:$0xff]
  %966 = vst [vmem:[%s963] sm:$0xff] %v965
  %s967 = scalar_lea.vmem %s2, 1928
  %s968 = scalar_lea.vmem %s0, 1928
  %v969 = vld [vmem:[%s968] sm:$0xff]
  %970 = vst [vmem:[%s967] sm:$0xff] %v969
  %s971 = scalar_lea.vmem %s2, 1936
  %s972 = scalar_lea.vmem %s0, 1936
  %v973 = vld [vmem:[%s972] sm:$0xff]
  %974 = vst [vmem:[%s971] sm:$0xff] %v973
  %s975 = scalar_lea.vmem %s2, 1944
  %s976 = scalar_lea.vmem %s0, 1944
  %v977 = vld [vmem:[%s976] sm:$0xff]
  %978 = vst [vmem:[%s975] sm:$0xff] %v977
  %s979 = scalar_lea.vmem %s2, 1952
  %s980 = scalar_lea.vmem %s0, 1952
  %v981 = vld [vmem:[%s980] sm:$0xff]
  %982 = vst [vmem:[%s979] sm:$0xff] %v981
  %s983 = scalar_lea.vmem %s2, 1960
  %s984 = scalar_lea.vmem %s0, 1960
  %v985 = vld [vmem:[%s984] sm:$0xff]
  %986 = vst [vmem:[%s983] sm:$0xff] %v985
  %s987 = scalar_lea.vmem %s2, 1968
  %s988 = scalar_lea.vmem %s0, 1968
  %v989 = vld [vmem:[%s988] sm:$0xff]
  %990 = vst [vmem:[%s987] sm:$0xff] %v989
  %s991 = scalar_lea.vmem %s2, 1976
  %s992 = scalar_lea.vmem %s0, 1976
  %v993 = vld [vmem:[%s992] sm:$0xff]
  %994 = vst [vmem:[%s991] sm:$0xff] %v993
  %s995 = scalar_lea.vmem %s2, 1984
  %s996 = scalar_lea.vmem %s0, 1984
  %v997 = vld [vmem:[%s996] sm:$0xff]
  %998 = vst [vmem:[%s995] sm:$0xff] %v997
  %s999 = scalar_lea.vmem %s2, 1992
  %s1000 = scalar_lea.vmem %s0, 1992
  %v1001 = vld [vmem:[%s1000] sm:$0xff]
  %1002 = vst [vmem:[%s999] sm:$0xff] %v1001
  %s1003 = scalar_lea.vmem %s2, 2000
  %s1004 = scalar_lea.vmem %s0, 2000
  %v1005 = vld [vmem:[%s1004] sm:$0xff]
  %1006 = vst [vmem:[%s1003] sm:$0xff] %v1005
  %s1007 = scalar_lea.vmem %s2, 2008
  %s1008 = scalar_lea.vmem %s0, 2008
  %v1009 = vld [vmem:[%s1008] sm:$0xff]
  %1010 = vst [vmem:[%s1007] sm:$0xff] %v1009
  %s1011 = scalar_lea.vmem %s2, 2016
  %s1012 = scalar_lea.vmem %s0, 2016
  %v1013 = vld [vmem:[%s1012] sm:$0xff]
  %1014 = vst [vmem:[%s1011] sm:$0xff] %v1013
  %s1015 = scalar_lea.vmem %s2, 2024
  %s1016 = scalar_lea.vmem %s0, 2024
  %v1017 = vld [vmem:[%s1016] sm:$0xff]
  %1018 = vst [vmem:[%s1015] sm:$0xff] %v1017
  %s1019 = scalar_lea.vmem %s2, 2032
  %s1020 = scalar_lea.vmem %s0, 2032
  %v1021 = vld [vmem:[%s1020] sm:$0xff]
  %1022 = vst [vmem:[%s1019] sm:$0xff] %v1021
  %s1023 = scalar_lea.vmem %s2, 2040
  %s1024 = scalar_lea.vmem %s0, 2040
  %v1025 = vld [vmem:[%s1024] sm:$0xff]
  %1026 = vst [vmem:[%s1023] sm:$0xff] %v1025
  %v1027 = vld [vmem:[%s1] sm:$0xff]
  %1028 = vst [vmem:[%s4] sm:$0xff] %v1027
  %s1029 = scalar_lea.vmem %s4, 8
  %s1030 = scalar_lea.vmem %s1, 8
  %v1031 = vld [vmem:[%s1030] sm:$0xff]
  %1032 = vst [vmem:[%s1029] sm:$0xff] %v1031
  %s1033 = scalar_lea.vmem %s4, 16
  %s1034 = scalar_lea.vmem %s1, 16
  %v1035 = vld [vmem:[%s1034] sm:$0xff]
  %1036 = vst [vmem:[%s1033] sm:$0xff] %v1035
  %s1037 = scalar_lea.vmem %s4, 24
  %s1038 = scalar_lea.vmem %s1, 24
  %v1039 = vld [vmem:[%s1038] sm:$0xff]
  %1040 = vst [vmem:[%s1037] sm:$0xff] %v1039
  %s1041 = scalar_lea.vmem %s4, 32
  %s1042 = scalar_lea.vmem %s1, 32
  %v1043 = vld [vmem:[%s1042] sm:$0xff]
  %1044 = vst [vmem:[%s1041] sm:$0xff] %v1043
  %s1045 = scalar_lea.vmem %s4, 40
  %s1046 = scalar_lea.vmem %s1, 40
  %v1047 = vld [vmem:[%s1046] sm:$0xff]
  %1048 = vst [vmem:[%s1045] sm:$0xff] %v1047
  %s1049 = scalar_lea.vmem %s4, 48
  %s1050 = scalar_lea.vmem %s1, 48
  %v1051 = vld [vmem:[%s1050] sm:$0xff]
  %1052 = vst [vmem:[%s1049] sm:$0xff] %v1051
  %s1053 = scalar_lea.vmem %s4, 56
  %s1054 = scalar_lea.vmem %s1, 56
  %v1055 = vld [vmem:[%s1054] sm:$0xff]
  %1056 = vst [vmem:[%s1053] sm:$0xff] %v1055
  %s1057 = scalar_lea.vmem %s4, 64
  %s1058 = scalar_lea.vmem %s1, 64
  %v1059 = vld [vmem:[%s1058] sm:$0xff]
  %1060 = vst [vmem:[%s1057] sm:$0xff] %v1059
  %s1061 = scalar_lea.vmem %s4, 72
  %s1062 = scalar_lea.vmem %s1, 72
  %v1063 = vld [vmem:[%s1062] sm:$0xff]
  %1064 = vst [vmem:[%s1061] sm:$0xff] %v1063
  %s1065 = scalar_lea.vmem %s4, 80
  %s1066 = scalar_lea.vmem %s1, 80
  %v1067 = vld [vmem:[%s1066] sm:$0xff]
  %1068 = vst [vmem:[%s1065] sm:$0xff] %v1067
  %s1069 = scalar_lea.vmem %s4, 88
  %s1070 = scalar_lea.vmem %s1, 88
  %v1071 = vld [vmem:[%s1070] sm:$0xff]
  %1072 = vst [vmem:[%s1069] sm:$0xff] %v1071
  %s1073 = scalar_lea.vmem %s4, 96
  %s1074 = scalar_lea.vmem %s1, 96
  %v1075 = vld [vmem:[%s1074] sm:$0xff]
  %1076 = vst [vmem:[%s1073] sm:$0xff] %v1075
  %s1077 = scalar_lea.vmem %s4, 104
  %s1078 = scalar_lea.vmem %s1, 104
  %v1079 = vld [vmem:[%s1078] sm:$0xff]
  %1080 = vst [vmem:[%s1077] sm:$0xff] %v1079
  %s1081 = scalar_lea.vmem %s4, 112
  %s1082 = scalar_lea.vmem %s1, 112
  %v1083 = vld [vmem:[%s1082] sm:$0xff]
  %1084 = vst [vmem:[%s1081] sm:$0xff] %v1083
  %s1085 = scalar_lea.vmem %s4, 120
  %s1086 = scalar_lea.vmem %s1, 120
  %v1087 = vld [vmem:[%s1086] sm:$0xff]
  %1088 = vst [vmem:[%s1085] sm:$0xff] %v1087
  %s1089 = scalar_lea.vmem %s4, 128
  %s1090 = scalar_lea.vmem %s1, 128
  %v1091 = vld [vmem:[%s1090] sm:$0xff]
  %1092 = vst [vmem:[%s1089] sm:$0xff] %v1091
  %s1093 = scalar_lea.vmem %s4, 136
  %s1094 = scalar_lea.vmem %s1, 136
  %v1095 = vld [vmem:[%s1094] sm:$0xff]
  %1096 = vst [vmem:[%s1093] sm:$0xff] %v1095
  %s1097 = scalar_lea.vmem %s4, 144
  %s1098 = scalar_lea.vmem %s1, 144
  %v1099 = vld [vmem:[%s1098] sm:$0xff]
  %1100 = vst [vmem:[%s1097] sm:$0xff] %v1099
  %s1101 = scalar_lea.vmem %s4, 152
  %s1102 = scalar_lea.vmem %s1, 152
  %v1103 = vld [vmem:[%s1102] sm:$0xff]
  %1104 = vst [vmem:[%s1101] sm:$0xff] %v1103
  %s1105 = scalar_lea.vmem %s4, 160
  %s1106 = scalar_lea.vmem %s1, 160
  %v1107 = vld [vmem:[%s1106] sm:$0xff]
  %1108 = vst [vmem:[%s1105] sm:$0xff] %v1107
  %s1109 = scalar_lea.vmem %s4, 168
  %s1110 = scalar_lea.vmem %s1, 168
  %v1111 = vld [vmem:[%s1110] sm:$0xff]
  %1112 = vst [vmem:[%s1109] sm:$0xff] %v1111
  %s1113 = scalar_lea.vmem %s4, 176
  %s1114 = scalar_lea.vmem %s1, 176
  %v1115 = vld [vmem:[%s1114] sm:$0xff]
  %1116 = vst [vmem:[%s1113] sm:$0xff] %v1115
  %s1117 = scalar_lea.vmem %s4, 184
  %s1118 = scalar_lea.vmem %s1, 184
  %v1119 = vld [vmem:[%s1118] sm:$0xff]
  %1120 = vst [vmem:[%s1117] sm:$0xff] %v1119
  %s1121 = scalar_lea.vmem %s4, 192
  %s1122 = scalar_lea.vmem %s1, 192
  %v1123 = vld [vmem:[%s1122] sm:$0xff]
  %1124 = vst [vmem:[%s1121] sm:$0xff] %v1123
  %s1125 = scalar_lea.vmem %s4, 200
  %s1126 = scalar_lea.vmem %s1, 200
  %v1127 = vld [vmem:[%s1126] sm:$0xff]
  %1128 = vst [vmem:[%s1125] sm:$0xff] %v1127
  %s1129 = scalar_lea.vmem %s4, 208
  %s1130 = scalar_lea.vmem %s1, 208
  %v1131 = vld [vmem:[%s1130] sm:$0xff]
  %1132 = vst [vmem:[%s1129] sm:$0xff] %v1131
  %s1133 = scalar_lea.vmem %s4, 216
  %s1134 = scalar_lea.vmem %s1, 216
  %v1135 = vld [vmem:[%s1134] sm:$0xff]
  %1136 = vst [vmem:[%s1133] sm:$0xff] %v1135
  %s1137 = scalar_lea.vmem %s4, 224
  %s1138 = scalar_lea.vmem %s1, 224
  %v1139 = vld [vmem:[%s1138] sm:$0xff]
  %1140 = vst [vmem:[%s1137] sm:$0xff] %v1139
  %s1141 = scalar_lea.vmem %s4, 232
  %s1142 = scalar_lea.vmem %s1, 232
  %v1143 = vld [vmem:[%s1142] sm:$0xff]
  %1144 = vst [vmem:[%s1141] sm:$0xff] %v1143
  %s1145 = scalar_lea.vmem %s4, 240
  %s1146 = scalar_lea.vmem %s1, 240
  %v1147 = vld [vmem:[%s1146] sm:$0xff]
  %1148 = vst [vmem:[%s1145] sm:$0xff] %v1147
  %s1149 = scalar_lea.vmem %s4, 248
  %s1150 = scalar_lea.vmem %s1, 248
  %v1151 = vld [vmem:[%s1150] sm:$0xff]
  %1152 = vst [vmem:[%s1149] sm:$0xff] %v1151
  %s1153 = scalar_lea.vmem %s4, 256
  %s1154 = scalar_lea.vmem %s1, 256
  %v1155 = vld [vmem:[%s1154] sm:$0xff]
  %1156 = vst [vmem:[%s1153] sm:$0xff] %v1155
  %s1157 = scalar_lea.vmem %s4, 264
  %s1158 = scalar_lea.vmem %s1, 264
  %v1159 = vld [vmem:[%s1158] sm:$0xff]
  %1160 = vst [vmem:[%s1157] sm:$0xff] %v1159
  %s1161 = scalar_lea.vmem %s4, 272
  %s1162 = scalar_lea.vmem %s1, 272
  %v1163 = vld [vmem:[%s1162] sm:$0xff]
  %1164 = vst [vmem:[%s1161] sm:$0xff] %v1163
  %s1165 = scalar_lea.vmem %s4, 280
  %s1166 = scalar_lea.vmem %s1, 280
  %v1167 = vld [vmem:[%s1166] sm:$0xff]
  %1168 = vst [vmem:[%s1165] sm:$0xff] %v1167
  %s1169 = scalar_lea.vmem %s4, 288
  %s1170 = scalar_lea.vmem %s1, 288
  %v1171 = vld [vmem:[%s1170] sm:$0xff]
  %1172 = vst [vmem:[%s1169] sm:$0xff] %v1171
  %s1173 = scalar_lea.vmem %s4, 296
  %s1174 = scalar_lea.vmem %s1, 296
  %v1175 = vld [vmem:[%s1174] sm:$0xff]
  %1176 = vst [vmem:[%s1173] sm:$0xff] %v1175
  %s1177 = scalar_lea.vmem %s4, 304
  %s1178 = scalar_lea.vmem %s1, 304
  %v1179 = vld [vmem:[%s1178] sm:$0xff]
  %1180 = vst [vmem:[%s1177] sm:$0xff] %v1179
  %s1181 = scalar_lea.vmem %s4, 312
  %s1182 = scalar_lea.vmem %s1, 312
  %v1183 = vld [vmem:[%s1182] sm:$0xff]
  %1184 = vst [vmem:[%s1181] sm:$0xff] %v1183
  %s1185 = scalar_lea.vmem %s4, 320
  %s1186 = scalar_lea.vmem %s1, 320
  %v1187 = vld [vmem:[%s1186] sm:$0xff]
  %1188 = vst [vmem:[%s1185] sm:$0xff] %v1187
  %s1189 = scalar_lea.vmem %s4, 328
  %s1190 = scalar_lea.vmem %s1, 328
  %v1191 = vld [vmem:[%s1190] sm:$0xff]
  %1192 = vst [vmem:[%s1189] sm:$0xff] %v1191
  %s1193 = scalar_lea.vmem %s4, 336
  %s1194 = scalar_lea.vmem %s1, 336
  %v1195 = vld [vmem:[%s1194] sm:$0xff]
  %1196 = vst [vmem:[%s1193] sm:$0xff] %v1195
  %s1197 = scalar_lea.vmem %s4, 344
  %s1198 = scalar_lea.vmem %s1, 344
  %v1199 = vld [vmem:[%s1198] sm:$0xff]
  %1200 = vst [vmem:[%s1197] sm:$0xff] %v1199
  %s1201 = scalar_lea.vmem %s4, 352
  %s1202 = scalar_lea.vmem %s1, 352
  %v1203 = vld [vmem:[%s1202] sm:$0xff]
  %1204 = vst [vmem:[%s1201] sm:$0xff] %v1203
  %s1205 = scalar_lea.vmem %s4, 360
  %s1206 = scalar_lea.vmem %s1, 360
  %v1207 = vld [vmem:[%s1206] sm:$0xff]
  %1208 = vst [vmem:[%s1205] sm:$0xff] %v1207
  %s1209 = scalar_lea.vmem %s4, 368
  %s1210 = scalar_lea.vmem %s1, 368
  %v1211 = vld [vmem:[%s1210] sm:$0xff]
  %1212 = vst [vmem:[%s1209] sm:$0xff] %v1211
  %s1213 = scalar_lea.vmem %s4, 376
  %s1214 = scalar_lea.vmem %s1, 376
  %v1215 = vld [vmem:[%s1214] sm:$0xff]
  %1216 = vst [vmem:[%s1213] sm:$0xff] %v1215
  %s1217 = scalar_lea.vmem %s4, 384
  %s1218 = scalar_lea.vmem %s1, 384
  %v1219 = vld [vmem:[%s1218] sm:$0xff]
  %1220 = vst [vmem:[%s1217] sm:$0xff] %v1219
  %s1221 = scalar_lea.vmem %s4, 392
  %s1222 = scalar_lea.vmem %s1, 392
  %v1223 = vld [vmem:[%s1222] sm:$0xff]
  %1224 = vst [vmem:[%s1221] sm:$0xff] %v1223
  %s1225 = scalar_lea.vmem %s4, 400
  %s1226 = scalar_lea.vmem %s1, 400
  %v1227 = vld [vmem:[%s1226] sm:$0xff]
  %1228 = vst [vmem:[%s1225] sm:$0xff] %v1227
  %s1229 = scalar_lea.vmem %s4, 408
  %s1230 = scalar_lea.vmem %s1, 408
  %v1231 = vld [vmem:[%s1230] sm:$0xff]
  %1232 = vst [vmem:[%s1229] sm:$0xff] %v1231
  %s1233 = scalar_lea.vmem %s4, 416
  %s1234 = scalar_lea.vmem %s1, 416
  %v1235 = vld [vmem:[%s1234] sm:$0xff]
  %1236 = vst [vmem:[%s1233] sm:$0xff] %v1235
  %s1237 = scalar_lea.vmem %s4, 424
  %s1238 = scalar_lea.vmem %s1, 424
  %v1239 = vld [vmem:[%s1238] sm:$0xff]
  %1240 = vst [vmem:[%s1237] sm:$0xff] %v1239
  %s1241 = scalar_lea.vmem %s4, 432
  %s1242 = scalar_lea.vmem %s1, 432
  %v1243 = vld [vmem:[%s1242] sm:$0xff]
  %1244 = vst [vmem:[%s1241] sm:$0xff] %v1243
  %s1245 = scalar_lea.vmem %s4, 440
  %s1246 = scalar_lea.vmem %s1, 440
  %v1247 = vld [vmem:[%s1246] sm:$0xff]
  %1248 = vst [vmem:[%s1245] sm:$0xff] %v1247
  %s1249 = scalar_lea.vmem %s4, 448
  %s1250 = scalar_lea.vmem %s1, 448
  %v1251 = vld [vmem:[%s1250] sm:$0xff]
  %1252 = vst [vmem:[%s1249] sm:$0xff] %v1251
  %s1253 = scalar_lea.vmem %s4, 456
  %s1254 = scalar_lea.vmem %s1, 456
  %v1255 = vld [vmem:[%s1254] sm:$0xff]
  %1256 = vst [vmem:[%s1253] sm:$0xff] %v1255
  %s1257 = scalar_lea.vmem %s4, 464
  %s1258 = scalar_lea.vmem %s1, 464
  %v1259 = vld [vmem:[%s1258] sm:$0xff]
  %1260 = vst [vmem:[%s1257] sm:$0xff] %v1259
  %s1261 = scalar_lea.vmem %s4, 472
  %s1262 = scalar_lea.vmem %s1, 472
  %v1263 = vld [vmem:[%s1262] sm:$0xff]
  %1264 = vst [vmem:[%s1261] sm:$0xff] %v1263
  %s1265 = scalar_lea.vmem %s4, 480
  %s1266 = scalar_lea.vmem %s1, 480
  %v1267 = vld [vmem:[%s1266] sm:$0xff]
  %1268 = vst [vmem:[%s1265] sm:$0xff] %v1267
  %s1269 = scalar_lea.vmem %s4, 488
  %s1270 = scalar_lea.vmem %s1, 488
  %v1271 = vld [vmem:[%s1270] sm:$0xff]
  %1272 = vst [vmem:[%s1269] sm:$0xff] %v1271
  %s1273 = scalar_lea.vmem %s4, 496
  %s1274 = scalar_lea.vmem %s1, 496
  %v1275 = vld [vmem:[%s1274] sm:$0xff]
  %1276 = vst [vmem:[%s1273] sm:$0xff] %v1275
  %s1277 = scalar_lea.vmem %s4, 504
  %s1278 = scalar_lea.vmem %s1, 504
  %v1279 = vld [vmem:[%s1278] sm:$0xff]
  %1280 = vst [vmem:[%s1277] sm:$0xff] %v1279
  %s1281 = scalar_lea.vmem %s4, 512
  %s1282 = scalar_lea.vmem %s1, 512
  %v1283 = vld [vmem:[%s1282] sm:$0xff]
  %1284 = vst [vmem:[%s1281] sm:$0xff] %v1283
  %s1285 = scalar_lea.vmem %s4, 520
  %s1286 = scalar_lea.vmem %s1, 520
  %v1287 = vld [vmem:[%s1286] sm:$0xff]
  %1288 = vst [vmem:[%s1285] sm:$0xff] %v1287
  %s1289 = scalar_lea.vmem %s4, 528
  %s1290 = scalar_lea.vmem %s1, 528
  %v1291 = vld [vmem:[%s1290] sm:$0xff]
  %1292 = vst [vmem:[%s1289] sm:$0xff] %v1291
  %s1293 = scalar_lea.vmem %s4, 536
  %s1294 = scalar_lea.vmem %s1, 536
  %v1295 = vld [vmem:[%s1294] sm:$0xff]
  %1296 = vst [vmem:[%s1293] sm:$0xff] %v1295
  %s1297 = scalar_lea.vmem %s4, 544
  %s1298 = scalar_lea.vmem %s1, 544
  %v1299 = vld [vmem:[%s1298] sm:$0xff]
  %1300 = vst [vmem:[%s1297] sm:$0xff] %v1299
  %s1301 = scalar_lea.vmem %s4, 552
  %s1302 = scalar_lea.vmem %s1, 552
  %v1303 = vld [vmem:[%s1302] sm:$0xff]
  %1304 = vst [vmem:[%s1301] sm:$0xff] %v1303
  %s1305 = scalar_lea.vmem %s4, 560
  %s1306 = scalar_lea.vmem %s1, 560
  %v1307 = vld [vmem:[%s1306] sm:$0xff]
  %1308 = vst [vmem:[%s1305] sm:$0xff] %v1307
  %s1309 = scalar_lea.vmem %s4, 568
  %s1310 = scalar_lea.vmem %s1, 568
  %v1311 = vld [vmem:[%s1310] sm:$0xff]
  %1312 = vst [vmem:[%s1309] sm:$0xff] %v1311
  %s1313 = scalar_lea.vmem %s4, 576
  %s1314 = scalar_lea.vmem %s1, 576
  %v1315 = vld [vmem:[%s1314] sm:$0xff]
  %1316 = vst [vmem:[%s1313] sm:$0xff] %v1315
  %s1317 = scalar_lea.vmem %s4, 584
  %s1318 = scalar_lea.vmem %s1, 584
  %v1319 = vld [vmem:[%s1318] sm:$0xff]
  %1320 = vst [vmem:[%s1317] sm:$0xff] %v1319
  %s1321 = scalar_lea.vmem %s4, 592
  %s1322 = scalar_lea.vmem %s1, 592
  %v1323 = vld [vmem:[%s1322] sm:$0xff]
  %1324 = vst [vmem:[%s1321] sm:$0xff] %v1323
  %s1325 = scalar_lea.vmem %s4, 600
  %s1326 = scalar_lea.vmem %s1, 600
  %v1327 = vld [vmem:[%s1326] sm:$0xff]
  %1328 = vst [vmem:[%s1325] sm:$0xff] %v1327
  %s1329 = scalar_lea.vmem %s4, 608
  %s1330 = scalar_lea.vmem %s1, 608
  %v1331 = vld [vmem:[%s1330] sm:$0xff]
  %1332 = vst [vmem:[%s1329] sm:$0xff] %v1331
  %s1333 = scalar_lea.vmem %s4, 616
  %s1334 = scalar_lea.vmem %s1, 616
  %v1335 = vld [vmem:[%s1334] sm:$0xff]
  %1336 = vst [vmem:[%s1333] sm:$0xff] %v1335
  %s1337 = scalar_lea.vmem %s4, 624
  %s1338 = scalar_lea.vmem %s1, 624
  %v1339 = vld [vmem:[%s1338] sm:$0xff]
  %1340 = vst [vmem:[%s1337] sm:$0xff] %v1339
  %s1341 = scalar_lea.vmem %s4, 632
  %s1342 = scalar_lea.vmem %s1, 632
  %v1343 = vld [vmem:[%s1342] sm:$0xff]
  %1344 = vst [vmem:[%s1341] sm:$0xff] %v1343
  %s1345 = scalar_lea.vmem %s4, 640
  %s1346 = scalar_lea.vmem %s1, 640
  %v1347 = vld [vmem:[%s1346] sm:$0xff]
  %1348 = vst [vmem:[%s1345] sm:$0xff] %v1347
  %s1349 = scalar_lea.vmem %s4, 648
  %s1350 = scalar_lea.vmem %s1, 648
  %v1351 = vld [vmem:[%s1350] sm:$0xff]
  %1352 = vst [vmem:[%s1349] sm:$0xff] %v1351
  %s1353 = scalar_lea.vmem %s4, 656
  %s1354 = scalar_lea.vmem %s1, 656
  %v1355 = vld [vmem:[%s1354] sm:$0xff]
  %1356 = vst [vmem:[%s1353] sm:$0xff] %v1355
  %s1357 = scalar_lea.vmem %s4, 664
  %s1358 = scalar_lea.vmem %s1, 664
  %v1359 = vld [vmem:[%s1358] sm:$0xff]
  %1360 = vst [vmem:[%s1357] sm:$0xff] %v1359
  %s1361 = scalar_lea.vmem %s4, 672
  %s1362 = scalar_lea.vmem %s1, 672
  %v1363 = vld [vmem:[%s1362] sm:$0xff]
  %1364 = vst [vmem:[%s1361] sm:$0xff] %v1363
  %s1365 = scalar_lea.vmem %s4, 680
  %s1366 = scalar_lea.vmem %s1, 680
  %v1367 = vld [vmem:[%s1366] sm:$0xff]
  %1368 = vst [vmem:[%s1365] sm:$0xff] %v1367
  %s1369 = scalar_lea.vmem %s4, 688
  %s1370 = scalar_lea.vmem %s1, 688
  %v1371 = vld [vmem:[%s1370] sm:$0xff]
  %1372 = vst [vmem:[%s1369] sm:$0xff] %v1371
  %s1373 = scalar_lea.vmem %s4, 696
  %s1374 = scalar_lea.vmem %s1, 696
  %v1375 = vld [vmem:[%s1374] sm:$0xff]
  %1376 = vst [vmem:[%s1373] sm:$0xff] %v1375
  %s1377 = scalar_lea.vmem %s4, 704
  %s1378 = scalar_lea.vmem %s1, 704
  %v1379 = vld [vmem:[%s1378] sm:$0xff]
  %1380 = vst [vmem:[%s1377] sm:$0xff] %v1379
  %s1381 = scalar_lea.vmem %s4, 712
  %s1382 = scalar_lea.vmem %s1, 712
  %v1383 = vld [vmem:[%s1382] sm:$0xff]
  %1384 = vst [vmem:[%s1381] sm:$0xff] %v1383
  %s1385 = scalar_lea.vmem %s4, 720
  %s1386 = scalar_lea.vmem %s1, 720
  %v1387 = vld [vmem:[%s1386] sm:$0xff]
  %1388 = vst [vmem:[%s1385] sm:$0xff] %v1387
  %s1389 = scalar_lea.vmem %s4, 728
  %s1390 = scalar_lea.vmem %s1, 728
  %v1391 = vld [vmem:[%s1390] sm:$0xff]
  %1392 = vst [vmem:[%s1389] sm:$0xff] %v1391
  %s1393 = scalar_lea.vmem %s4, 736
  %s1394 = scalar_lea.vmem %s1, 736
  %v1395 = vld [vmem:[%s1394] sm:$0xff]
  %1396 = vst [vmem:[%s1393] sm:$0xff] %v1395
  %s1397 = scalar_lea.vmem %s4, 744
  %s1398 = scalar_lea.vmem %s1, 744
  %v1399 = vld [vmem:[%s1398] sm:$0xff]
  %1400 = vst [vmem:[%s1397] sm:$0xff] %v1399
  %s1401 = scalar_lea.vmem %s4, 752
  %s1402 = scalar_lea.vmem %s1, 752
  %v1403 = vld [vmem:[%s1402] sm:$0xff]
  %1404 = vst [vmem:[%s1401] sm:$0xff] %v1403
  %s1405 = scalar_lea.vmem %s4, 760
  %s1406 = scalar_lea.vmem %s1, 760
  %v1407 = vld [vmem:[%s1406] sm:$0xff]
  %1408 = vst [vmem:[%s1405] sm:$0xff] %v1407
  %s1409 = scalar_lea.vmem %s4, 768
  %s1410 = scalar_lea.vmem %s1, 768
  %v1411 = vld [vmem:[%s1410] sm:$0xff]
  %1412 = vst [vmem:[%s1409] sm:$0xff] %v1411
  %s1413 = scalar_lea.vmem %s4, 776
  %s1414 = scalar_lea.vmem %s1, 776
  %v1415 = vld [vmem:[%s1414] sm:$0xff]
  %1416 = vst [vmem:[%s1413] sm:$0xff] %v1415
  %s1417 = scalar_lea.vmem %s4, 784
  %s1418 = scalar_lea.vmem %s1, 784
  %v1419 = vld [vmem:[%s1418] sm:$0xff]
  %1420 = vst [vmem:[%s1417] sm:$0xff] %v1419
  %s1421 = scalar_lea.vmem %s4, 792
  %s1422 = scalar_lea.vmem %s1, 792
  %v1423 = vld [vmem:[%s1422] sm:$0xff]
  %1424 = vst [vmem:[%s1421] sm:$0xff] %v1423
  %s1425 = scalar_lea.vmem %s4, 800
  %s1426 = scalar_lea.vmem %s1, 800
  %v1427 = vld [vmem:[%s1426] sm:$0xff]
  %1428 = vst [vmem:[%s1425] sm:$0xff] %v1427
  %s1429 = scalar_lea.vmem %s4, 808
  %s1430 = scalar_lea.vmem %s1, 808
  %v1431 = vld [vmem:[%s1430] sm:$0xff]
  %1432 = vst [vmem:[%s1429] sm:$0xff] %v1431
  %s1433 = scalar_lea.vmem %s4, 816
  %s1434 = scalar_lea.vmem %s1, 816
  %v1435 = vld [vmem:[%s1434] sm:$0xff]
  %1436 = vst [vmem:[%s1433] sm:$0xff] %v1435
  %s1437 = scalar_lea.vmem %s4, 824
  %s1438 = scalar_lea.vmem %s1, 824
  %v1439 = vld [vmem:[%s1438] sm:$0xff]
  %1440 = vst [vmem:[%s1437] sm:$0xff] %v1439
  %s1441 = scalar_lea.vmem %s4, 832
  %s1442 = scalar_lea.vmem %s1, 832
  %v1443 = vld [vmem:[%s1442] sm:$0xff]
  %1444 = vst [vmem:[%s1441] sm:$0xff] %v1443
  %s1445 = scalar_lea.vmem %s4, 840
  %s1446 = scalar_lea.vmem %s1, 840
  %v1447 = vld [vmem:[%s1446] sm:$0xff]
  %1448 = vst [vmem:[%s1445] sm:$0xff] %v1447
  %s1449 = scalar_lea.vmem %s4, 848
  %s1450 = scalar_lea.vmem %s1, 848
  %v1451 = vld [vmem:[%s1450] sm:$0xff]
  %1452 = vst [vmem:[%s1449] sm:$0xff] %v1451
  %s1453 = scalar_lea.vmem %s4, 856
  %s1454 = scalar_lea.vmem %s1, 856
  %v1455 = vld [vmem:[%s1454] sm:$0xff]
  %1456 = vst [vmem:[%s1453] sm:$0xff] %v1455
  %s1457 = scalar_lea.vmem %s4, 864
  %s1458 = scalar_lea.vmem %s1, 864
  %v1459 = vld [vmem:[%s1458] sm:$0xff]
  %1460 = vst [vmem:[%s1457] sm:$0xff] %v1459
  %s1461 = scalar_lea.vmem %s4, 872
  %s1462 = scalar_lea.vmem %s1, 872
  %v1463 = vld [vmem:[%s1462] sm:$0xff]
  %1464 = vst [vmem:[%s1461] sm:$0xff] %v1463
  %s1465 = scalar_lea.vmem %s4, 880
  %s1466 = scalar_lea.vmem %s1, 880
  %v1467 = vld [vmem:[%s1466] sm:$0xff]
  %1468 = vst [vmem:[%s1465] sm:$0xff] %v1467
  %s1469 = scalar_lea.vmem %s4, 888
  %s1470 = scalar_lea.vmem %s1, 888
  %v1471 = vld [vmem:[%s1470] sm:$0xff]
  %1472 = vst [vmem:[%s1469] sm:$0xff] %v1471
  %s1473 = scalar_lea.vmem %s4, 896
  %s1474 = scalar_lea.vmem %s1, 896
  %v1475 = vld [vmem:[%s1474] sm:$0xff]
  %1476 = vst [vmem:[%s1473] sm:$0xff] %v1475
  %s1477 = scalar_lea.vmem %s4, 904
  %s1478 = scalar_lea.vmem %s1, 904
  %v1479 = vld [vmem:[%s1478] sm:$0xff]
  %1480 = vst [vmem:[%s1477] sm:$0xff] %v1479
  %s1481 = scalar_lea.vmem %s4, 912
  %s1482 = scalar_lea.vmem %s1, 912
  %v1483 = vld [vmem:[%s1482] sm:$0xff]
  %1484 = vst [vmem:[%s1481] sm:$0xff] %v1483
  %s1485 = scalar_lea.vmem %s4, 920
  %s1486 = scalar_lea.vmem %s1, 920
  %v1487 = vld [vmem:[%s1486] sm:$0xff]
  %1488 = vst [vmem:[%s1485] sm:$0xff] %v1487
  %s1489 = scalar_lea.vmem %s4, 928
  %s1490 = scalar_lea.vmem %s1, 928
  %v1491 = vld [vmem:[%s1490] sm:$0xff]
  %1492 = vst [vmem:[%s1489] sm:$0xff] %v1491
  %s1493 = scalar_lea.vmem %s4, 936
  %s1494 = scalar_lea.vmem %s1, 936
  %v1495 = vld [vmem:[%s1494] sm:$0xff]
  %1496 = vst [vmem:[%s1493] sm:$0xff] %v1495
  %s1497 = scalar_lea.vmem %s4, 944
  %s1498 = scalar_lea.vmem %s1, 944
  %v1499 = vld [vmem:[%s1498] sm:$0xff]
  %1500 = vst [vmem:[%s1497] sm:$0xff] %v1499
  %s1501 = scalar_lea.vmem %s4, 952
  %s1502 = scalar_lea.vmem %s1, 952
  %v1503 = vld [vmem:[%s1502] sm:$0xff]
  %1504 = vst [vmem:[%s1501] sm:$0xff] %v1503
  %s1505 = scalar_lea.vmem %s4, 960
  %s1506 = scalar_lea.vmem %s1, 960
  %v1507 = vld [vmem:[%s1506] sm:$0xff]
  %1508 = vst [vmem:[%s1505] sm:$0xff] %v1507
  %s1509 = scalar_lea.vmem %s4, 968
  %s1510 = scalar_lea.vmem %s1, 968
  %v1511 = vld [vmem:[%s1510] sm:$0xff]
  %1512 = vst [vmem:[%s1509] sm:$0xff] %v1511
  %s1513 = scalar_lea.vmem %s4, 976
  %s1514 = scalar_lea.vmem %s1, 976
  %v1515 = vld [vmem:[%s1514] sm:$0xff]
  %1516 = vst [vmem:[%s1513] sm:$0xff] %v1515
  %s1517 = scalar_lea.vmem %s4, 984
  %s1518 = scalar_lea.vmem %s1, 984
  %v1519 = vld [vmem:[%s1518] sm:$0xff]
  %1520 = vst [vmem:[%s1517] sm:$0xff] %v1519
  %s1521 = scalar_lea.vmem %s4, 992
  %s1522 = scalar_lea.vmem %s1, 992
  %v1523 = vld [vmem:[%s1522] sm:$0xff]
  %1524 = vst [vmem:[%s1521] sm:$0xff] %v1523
  %s1525 = scalar_lea.vmem %s4, 1000
  %s1526 = scalar_lea.vmem %s1, 1000
  %v1527 = vld [vmem:[%s1526] sm:$0xff]
  %1528 = vst [vmem:[%s1525] sm:$0xff] %v1527
  %s1529 = scalar_lea.vmem %s4, 1008
  %s1530 = scalar_lea.vmem %s1, 1008
  %v1531 = vld [vmem:[%s1530] sm:$0xff]
  %1532 = vst [vmem:[%s1529] sm:$0xff] %v1531
  %s1533 = scalar_lea.vmem %s4, 1016
  %s1534 = scalar_lea.vmem %s1, 1016
  %v1535 = vld [vmem:[%s1534] sm:$0xff]
  %1536 = vst [vmem:[%s1533] sm:$0xff] %v1535
  %s1537 = scalar_lea.vmem %s4, 1024
  %s1538 = scalar_lea.vmem %s1, 1024
  %v1539 = vld [vmem:[%s1538] sm:$0xff]
  %1540 = vst [vmem:[%s1537] sm:$0xff] %v1539
  %s1541 = scalar_lea.vmem %s4, 1032
  %s1542 = scalar_lea.vmem %s1, 1032
  %v1543 = vld [vmem:[%s1542] sm:$0xff]
  %1544 = vst [vmem:[%s1541] sm:$0xff] %v1543
  %s1545 = scalar_lea.vmem %s4, 1040
  %s1546 = scalar_lea.vmem %s1, 1040
  %v1547 = vld [vmem:[%s1546] sm:$0xff]
  %1548 = vst [vmem:[%s1545] sm:$0xff] %v1547
  %s1549 = scalar_lea.vmem %s4, 1048
  %s1550 = scalar_lea.vmem %s1, 1048
  %v1551 = vld [vmem:[%s1550] sm:$0xff]
  %1552 = vst [vmem:[%s1549] sm:$0xff] %v1551
  %s1553 = scalar_lea.vmem %s4, 1056
  %s1554 = scalar_lea.vmem %s1, 1056
  %v1555 = vld [vmem:[%s1554] sm:$0xff]
  %1556 = vst [vmem:[%s1553] sm:$0xff] %v1555
  %s1557 = scalar_lea.vmem %s4, 1064
  %s1558 = scalar_lea.vmem %s1, 1064
  %v1559 = vld [vmem:[%s1558] sm:$0xff]
  %1560 = vst [vmem:[%s1557] sm:$0xff] %v1559
  %s1561 = scalar_lea.vmem %s4, 1072
  %s1562 = scalar_lea.vmem %s1, 1072
  %v1563 = vld [vmem:[%s1562] sm:$0xff]
  %1564 = vst [vmem:[%s1561] sm:$0xff] %v1563
  %s1565 = scalar_lea.vmem %s4, 1080
  %s1566 = scalar_lea.vmem %s1, 1080
  %v1567 = vld [vmem:[%s1566] sm:$0xff]
  %1568 = vst [vmem:[%s1565] sm:$0xff] %v1567
  %s1569 = scalar_lea.vmem %s4, 1088
  %s1570 = scalar_lea.vmem %s1, 1088
  %v1571 = vld [vmem:[%s1570] sm:$0xff]
  %1572 = vst [vmem:[%s1569] sm:$0xff] %v1571
  %s1573 = scalar_lea.vmem %s4, 1096
  %s1574 = scalar_lea.vmem %s1, 1096
  %v1575 = vld [vmem:[%s1574] sm:$0xff]
  %1576 = vst [vmem:[%s1573] sm:$0xff] %v1575
  %s1577 = scalar_lea.vmem %s4, 1104
  %s1578 = scalar_lea.vmem %s1, 1104
  %v1579 = vld [vmem:[%s1578] sm:$0xff]
  %1580 = vst [vmem:[%s1577] sm:$0xff] %v1579
  %s1581 = scalar_lea.vmem %s4, 1112
  %s1582 = scalar_lea.vmem %s1, 1112
  %v1583 = vld [vmem:[%s1582] sm:$0xff]
  %1584 = vst [vmem:[%s1581] sm:$0xff] %v1583
  %s1585 = scalar_lea.vmem %s4, 1120
  %s1586 = scalar_lea.vmem %s1, 1120
  %v1587 = vld [vmem:[%s1586] sm:$0xff]
  %1588 = vst [vmem:[%s1585] sm:$0xff] %v1587
  %s1589 = scalar_lea.vmem %s4, 1128
  %s1590 = scalar_lea.vmem %s1, 1128
  %v1591 = vld [vmem:[%s1590] sm:$0xff]
  %1592 = vst [vmem:[%s1589] sm:$0xff] %v1591
  %s1593 = scalar_lea.vmem %s4, 1136
  %s1594 = scalar_lea.vmem %s1, 1136
  %v1595 = vld [vmem:[%s1594] sm:$0xff]
  %1596 = vst [vmem:[%s1593] sm:$0xff] %v1595
  %s1597 = scalar_lea.vmem %s4, 1144
  %s1598 = scalar_lea.vmem %s1, 1144
  %v1599 = vld [vmem:[%s1598] sm:$0xff]
  %1600 = vst [vmem:[%s1597] sm:$0xff] %v1599
  %s1601 = scalar_lea.vmem %s4, 1152
  %s1602 = scalar_lea.vmem %s1, 1152
  %v1603 = vld [vmem:[%s1602] sm:$0xff]
  %1604 = vst [vmem:[%s1601] sm:$0xff] %v1603
  %s1605 = scalar_lea.vmem %s4, 1160
  %s1606 = scalar_lea.vmem %s1, 1160
  %v1607 = vld [vmem:[%s1606] sm:$0xff]
  %1608 = vst [vmem:[%s1605] sm:$0xff] %v1607
  %s1609 = scalar_lea.vmem %s4, 1168
  %s1610 = scalar_lea.vmem %s1, 1168
  %v1611 = vld [vmem:[%s1610] sm:$0xff]
  %1612 = vst [vmem:[%s1609] sm:$0xff] %v1611
  %s1613 = scalar_lea.vmem %s4, 1176
  %s1614 = scalar_lea.vmem %s1, 1176
  %v1615 = vld [vmem:[%s1614] sm:$0xff]
  %1616 = vst [vmem:[%s1613] sm:$0xff] %v1615
  %s1617 = scalar_lea.vmem %s4, 1184
  %s1618 = scalar_lea.vmem %s1, 1184
  %v1619 = vld [vmem:[%s1618] sm:$0xff]
  %1620 = vst [vmem:[%s1617] sm:$0xff] %v1619
  %s1621 = scalar_lea.vmem %s4, 1192
  %s1622 = scalar_lea.vmem %s1, 1192
  %v1623 = vld [vmem:[%s1622] sm:$0xff]
  %1624 = vst [vmem:[%s1621] sm:$0xff] %v1623
  %s1625 = scalar_lea.vmem %s4, 1200
  %s1626 = scalar_lea.vmem %s1, 1200
  %v1627 = vld [vmem:[%s1626] sm:$0xff]
  %1628 = vst [vmem:[%s1625] sm:$0xff] %v1627
  %s1629 = scalar_lea.vmem %s4, 1208
  %s1630 = scalar_lea.vmem %s1, 1208
  %v1631 = vld [vmem:[%s1630] sm:$0xff]
  %1632 = vst [vmem:[%s1629] sm:$0xff] %v1631
  %s1633 = scalar_lea.vmem %s4, 1216
  %s1634 = scalar_lea.vmem %s1, 1216
  %v1635 = vld [vmem:[%s1634] sm:$0xff]
  %1636 = vst [vmem:[%s1633] sm:$0xff] %v1635
  %s1637 = scalar_lea.vmem %s4, 1224
  %s1638 = scalar_lea.vmem %s1, 1224
  %v1639 = vld [vmem:[%s1638] sm:$0xff]
  %1640 = vst [vmem:[%s1637] sm:$0xff] %v1639
  %s1641 = scalar_lea.vmem %s4, 1232
  %s1642 = scalar_lea.vmem %s1, 1232
  %v1643 = vld [vmem:[%s1642] sm:$0xff]
  %1644 = vst [vmem:[%s1641] sm:$0xff] %v1643
  %s1645 = scalar_lea.vmem %s4, 1240
  %s1646 = scalar_lea.vmem %s1, 1240
  %v1647 = vld [vmem:[%s1646] sm:$0xff]
  %1648 = vst [vmem:[%s1645] sm:$0xff] %v1647
  %s1649 = scalar_lea.vmem %s4, 1248
  %s1650 = scalar_lea.vmem %s1, 1248
  %v1651 = vld [vmem:[%s1650] sm:$0xff]
  %1652 = vst [vmem:[%s1649] sm:$0xff] %v1651
  %s1653 = scalar_lea.vmem %s4, 1256
  %s1654 = scalar_lea.vmem %s1, 1256
  %v1655 = vld [vmem:[%s1654] sm:$0xff]
  %1656 = vst [vmem:[%s1653] sm:$0xff] %v1655
  %s1657 = scalar_lea.vmem %s4, 1264
  %s1658 = scalar_lea.vmem %s1, 1264
  %v1659 = vld [vmem:[%s1658] sm:$0xff]
  %1660 = vst [vmem:[%s1657] sm:$0xff] %v1659
  %s1661 = scalar_lea.vmem %s4, 1272
  %s1662 = scalar_lea.vmem %s1, 1272
  %v1663 = vld [vmem:[%s1662] sm:$0xff]
  %1664 = vst [vmem:[%s1661] sm:$0xff] %v1663
  %s1665 = scalar_lea.vmem %s4, 1280
  %s1666 = scalar_lea.vmem %s1, 1280
  %v1667 = vld [vmem:[%s1666] sm:$0xff]
  %1668 = vst [vmem:[%s1665] sm:$0xff] %v1667
  %s1669 = scalar_lea.vmem %s4, 1288
  %s1670 = scalar_lea.vmem %s1, 1288
  %v1671 = vld [vmem:[%s1670] sm:$0xff]
  %1672 = vst [vmem:[%s1669] sm:$0xff] %v1671
  %s1673 = scalar_lea.vmem %s4, 1296
  %s1674 = scalar_lea.vmem %s1, 1296
  %v1675 = vld [vmem:[%s1674] sm:$0xff]
  %1676 = vst [vmem:[%s1673] sm:$0xff] %v1675
  %s1677 = scalar_lea.vmem %s4, 1304
  %s1678 = scalar_lea.vmem %s1, 1304
  %v1679 = vld [vmem:[%s1678] sm:$0xff]
  %1680 = vst [vmem:[%s1677] sm:$0xff] %v1679
  %s1681 = scalar_lea.vmem %s4, 1312
  %s1682 = scalar_lea.vmem %s1, 1312
  %v1683 = vld [vmem:[%s1682] sm:$0xff]
  %1684 = vst [vmem:[%s1681] sm:$0xff] %v1683
  %s1685 = scalar_lea.vmem %s4, 1320
  %s1686 = scalar_lea.vmem %s1, 1320
  %v1687 = vld [vmem:[%s1686] sm:$0xff]
  %1688 = vst [vmem:[%s1685] sm:$0xff] %v1687
  %s1689 = scalar_lea.vmem %s4, 1328
  %s1690 = scalar_lea.vmem %s1, 1328
  %v1691 = vld [vmem:[%s1690] sm:$0xff]
  %1692 = vst [vmem:[%s1689] sm:$0xff] %v1691
  %s1693 = scalar_lea.vmem %s4, 1336
  %s1694 = scalar_lea.vmem %s1, 1336
  %v1695 = vld [vmem:[%s1694] sm:$0xff]
  %1696 = vst [vmem:[%s1693] sm:$0xff] %v1695
  %s1697 = scalar_lea.vmem %s4, 1344
  %s1698 = scalar_lea.vmem %s1, 1344
  %v1699 = vld [vmem:[%s1698] sm:$0xff]
  %1700 = vst [vmem:[%s1697] sm:$0xff] %v1699
  %s1701 = scalar_lea.vmem %s4, 1352
  %s1702 = scalar_lea.vmem %s1, 1352
  %v1703 = vld [vmem:[%s1702] sm:$0xff]
  %1704 = vst [vmem:[%s1701] sm:$0xff] %v1703
  %s1705 = scalar_lea.vmem %s4, 1360
  %s1706 = scalar_lea.vmem %s1, 1360
  %v1707 = vld [vmem:[%s1706] sm:$0xff]
  %1708 = vst [vmem:[%s1705] sm:$0xff] %v1707
  %s1709 = scalar_lea.vmem %s4, 1368
  %s1710 = scalar_lea.vmem %s1, 1368
  %v1711 = vld [vmem:[%s1710] sm:$0xff]
  %1712 = vst [vmem:[%s1709] sm:$0xff] %v1711
  %s1713 = scalar_lea.vmem %s4, 1376
  %s1714 = scalar_lea.vmem %s1, 1376
  %v1715 = vld [vmem:[%s1714] sm:$0xff]
  %1716 = vst [vmem:[%s1713] sm:$0xff] %v1715
  %s1717 = scalar_lea.vmem %s4, 1384
  %s1718 = scalar_lea.vmem %s1, 1384
  %v1719 = vld [vmem:[%s1718] sm:$0xff]
  %1720 = vst [vmem:[%s1717] sm:$0xff] %v1719
  %s1721 = scalar_lea.vmem %s4, 1392
  %s1722 = scalar_lea.vmem %s1, 1392
  %v1723 = vld [vmem:[%s1722] sm:$0xff]
  %1724 = vst [vmem:[%s1721] sm:$0xff] %v1723
  %s1725 = scalar_lea.vmem %s4, 1400
  %s1726 = scalar_lea.vmem %s1, 1400
  %v1727 = vld [vmem:[%s1726] sm:$0xff]
  %1728 = vst [vmem:[%s1725] sm:$0xff] %v1727
  %s1729 = scalar_lea.vmem %s4, 1408
  %s1730 = scalar_lea.vmem %s1, 1408
  %v1731 = vld [vmem:[%s1730] sm:$0xff]
  %1732 = vst [vmem:[%s1729] sm:$0xff] %v1731
  %s1733 = scalar_lea.vmem %s4, 1416
  %s1734 = scalar_lea.vmem %s1, 1416
  %v1735 = vld [vmem:[%s1734] sm:$0xff]
  %1736 = vst [vmem:[%s1733] sm:$0xff] %v1735
  %s1737 = scalar_lea.vmem %s4, 1424
  %s1738 = scalar_lea.vmem %s1, 1424
  %v1739 = vld [vmem:[%s1738] sm:$0xff]
  %1740 = vst [vmem:[%s1737] sm:$0xff] %v1739
  %s1741 = scalar_lea.vmem %s4, 1432
  %s1742 = scalar_lea.vmem %s1, 1432
  %v1743 = vld [vmem:[%s1742] sm:$0xff]
  %1744 = vst [vmem:[%s1741] sm:$0xff] %v1743
  %s1745 = scalar_lea.vmem %s4, 1440
  %s1746 = scalar_lea.vmem %s1, 1440
  %v1747 = vld [vmem:[%s1746] sm:$0xff]
  %1748 = vst [vmem:[%s1745] sm:$0xff] %v1747
  %s1749 = scalar_lea.vmem %s4, 1448
  %s1750 = scalar_lea.vmem %s1, 1448
  %v1751 = vld [vmem:[%s1750] sm:$0xff]
  %1752 = vst [vmem:[%s1749] sm:$0xff] %v1751
  %s1753 = scalar_lea.vmem %s4, 1456
  %s1754 = scalar_lea.vmem %s1, 1456
  %v1755 = vld [vmem:[%s1754] sm:$0xff]
  %1756 = vst [vmem:[%s1753] sm:$0xff] %v1755
  %s1757 = scalar_lea.vmem %s4, 1464
  %s1758 = scalar_lea.vmem %s1, 1464
  %v1759 = vld [vmem:[%s1758] sm:$0xff]
  %1760 = vst [vmem:[%s1757] sm:$0xff] %v1759
  %s1761 = scalar_lea.vmem %s4, 1472
  %s1762 = scalar_lea.vmem %s1, 1472
  %v1763 = vld [vmem:[%s1762] sm:$0xff]
  %1764 = vst [vmem:[%s1761] sm:$0xff] %v1763
  %s1765 = scalar_lea.vmem %s4, 1480
  %s1766 = scalar_lea.vmem %s1, 1480
  %v1767 = vld [vmem:[%s1766] sm:$0xff]
  %1768 = vst [vmem:[%s1765] sm:$0xff] %v1767
  %s1769 = scalar_lea.vmem %s4, 1488
  %s1770 = scalar_lea.vmem %s1, 1488
  %v1771 = vld [vmem:[%s1770] sm:$0xff]
  %1772 = vst [vmem:[%s1769] sm:$0xff] %v1771
  %s1773 = scalar_lea.vmem %s4, 1496
  %s1774 = scalar_lea.vmem %s1, 1496
  %v1775 = vld [vmem:[%s1774] sm:$0xff]
  %1776 = vst [vmem:[%s1773] sm:$0xff] %v1775
  %s1777 = scalar_lea.vmem %s4, 1504
  %s1778 = scalar_lea.vmem %s1, 1504
  %v1779 = vld [vmem:[%s1778] sm:$0xff]
  %1780 = vst [vmem:[%s1777] sm:$0xff] %v1779
  %s1781 = scalar_lea.vmem %s4, 1512
  %s1782 = scalar_lea.vmem %s1, 1512
  %v1783 = vld [vmem:[%s1782] sm:$0xff]
  %1784 = vst [vmem:[%s1781] sm:$0xff] %v1783
  %s1785 = scalar_lea.vmem %s4, 1520
  %s1786 = scalar_lea.vmem %s1, 1520
  %v1787 = vld [vmem:[%s1786] sm:$0xff]
  %1788 = vst [vmem:[%s1785] sm:$0xff] %v1787
  %s1789 = scalar_lea.vmem %s4, 1528
  %s1790 = scalar_lea.vmem %s1, 1528
  %v1791 = vld [vmem:[%s1790] sm:$0xff]
  %1792 = vst [vmem:[%s1789] sm:$0xff] %v1791
  %s1793 = scalar_lea.vmem %s4, 1536
  %s1794 = scalar_lea.vmem %s1, 1536
  %v1795 = vld [vmem:[%s1794] sm:$0xff]
  %1796 = vst [vmem:[%s1793] sm:$0xff] %v1795
  %s1797 = scalar_lea.vmem %s4, 1544
  %s1798 = scalar_lea.vmem %s1, 1544
  %v1799 = vld [vmem:[%s1798] sm:$0xff]
  %1800 = vst [vmem:[%s1797] sm:$0xff] %v1799
  %s1801 = scalar_lea.vmem %s4, 1552
  %s1802 = scalar_lea.vmem %s1, 1552
  %v1803 = vld [vmem:[%s1802] sm:$0xff]
  %1804 = vst [vmem:[%s1801] sm:$0xff] %v1803
  %s1805 = scalar_lea.vmem %s4, 1560
  %s1806 = scalar_lea.vmem %s1, 1560
  %v1807 = vld [vmem:[%s1806] sm:$0xff]
  %1808 = vst [vmem:[%s1805] sm:$0xff] %v1807
  %s1809 = scalar_lea.vmem %s4, 1568
  %s1810 = scalar_lea.vmem %s1, 1568
  %v1811 = vld [vmem:[%s1810] sm:$0xff]
  %1812 = vst [vmem:[%s1809] sm:$0xff] %v1811
  %s1813 = scalar_lea.vmem %s4, 1576
  %s1814 = scalar_lea.vmem %s1, 1576
  %v1815 = vld [vmem:[%s1814] sm:$0xff]
  %1816 = vst [vmem:[%s1813] sm:$0xff] %v1815
  %s1817 = scalar_lea.vmem %s4, 1584
  %s1818 = scalar_lea.vmem %s1, 1584
  %v1819 = vld [vmem:[%s1818] sm:$0xff]
  %1820 = vst [vmem:[%s1817] sm:$0xff] %v1819
  %s1821 = scalar_lea.vmem %s4, 1592
  %s1822 = scalar_lea.vmem %s1, 1592
  %v1823 = vld [vmem:[%s1822] sm:$0xff]
  %1824 = vst [vmem:[%s1821] sm:$0xff] %v1823
  %s1825 = scalar_lea.vmem %s4, 1600
  %s1826 = scalar_lea.vmem %s1, 1600
  %v1827 = vld [vmem:[%s1826] sm:$0xff]
  %1828 = vst [vmem:[%s1825] sm:$0xff] %v1827
  %s1829 = scalar_lea.vmem %s4, 1608
  %s1830 = scalar_lea.vmem %s1, 1608
  %v1831 = vld [vmem:[%s1830] sm:$0xff]
  %1832 = vst [vmem:[%s1829] sm:$0xff] %v1831
  %s1833 = scalar_lea.vmem %s4, 1616
  %s1834 = scalar_lea.vmem %s1, 1616
  %v1835 = vld [vmem:[%s1834] sm:$0xff]
  %1836 = vst [vmem:[%s1833] sm:$0xff] %v1835
  %s1837 = scalar_lea.vmem %s4, 1624
  %s1838 = scalar_lea.vmem %s1, 1624
  %v1839 = vld [vmem:[%s1838] sm:$0xff]
  %1840 = vst [vmem:[%s1837] sm:$0xff] %v1839
  %s1841 = scalar_lea.vmem %s4, 1632
  %s1842 = scalar_lea.vmem %s1, 1632
  %v1843 = vld [vmem:[%s1842] sm:$0xff]
  %1844 = vst [vmem:[%s1841] sm:$0xff] %v1843
  %s1845 = scalar_lea.vmem %s4, 1640
  %s1846 = scalar_lea.vmem %s1, 1640
  %v1847 = vld [vmem:[%s1846] sm:$0xff]
  %1848 = vst [vmem:[%s1845] sm:$0xff] %v1847
  %s1849 = scalar_lea.vmem %s4, 1648
  %s1850 = scalar_lea.vmem %s1, 1648
  %v1851 = vld [vmem:[%s1850] sm:$0xff]
  %1852 = vst [vmem:[%s1849] sm:$0xff] %v1851
  %s1853 = scalar_lea.vmem %s4, 1656
  %s1854 = scalar_lea.vmem %s1, 1656
  %v1855 = vld [vmem:[%s1854] sm:$0xff]
  %1856 = vst [vmem:[%s1853] sm:$0xff] %v1855
  %s1857 = scalar_lea.vmem %s4, 1664
  %s1858 = scalar_lea.vmem %s1, 1664
  %v1859 = vld [vmem:[%s1858] sm:$0xff]
  %1860 = vst [vmem:[%s1857] sm:$0xff] %v1859
  %s1861 = scalar_lea.vmem %s4, 1672
  %s1862 = scalar_lea.vmem %s1, 1672
  %v1863 = vld [vmem:[%s1862] sm:$0xff]
  %1864 = vst [vmem:[%s1861] sm:$0xff] %v1863
  %s1865 = scalar_lea.vmem %s4, 1680
  %s1866 = scalar_lea.vmem %s1, 1680
  %v1867 = vld [vmem:[%s1866] sm:$0xff]
  %1868 = vst [vmem:[%s1865] sm:$0xff] %v1867
  %s1869 = scalar_lea.vmem %s4, 1688
  %s1870 = scalar_lea.vmem %s1, 1688
  %v1871 = vld [vmem:[%s1870] sm:$0xff]
  %1872 = vst [vmem:[%s1869] sm:$0xff] %v1871
  %s1873 = scalar_lea.vmem %s4, 1696
  %s1874 = scalar_lea.vmem %s1, 1696
  %v1875 = vld [vmem:[%s1874] sm:$0xff]
  %1876 = vst [vmem:[%s1873] sm:$0xff] %v1875
  %s1877 = scalar_lea.vmem %s4, 1704
  %s1878 = scalar_lea.vmem %s1, 1704
  %v1879 = vld [vmem:[%s1878] sm:$0xff]
  %1880 = vst [vmem:[%s1877] sm:$0xff] %v1879
  %s1881 = scalar_lea.vmem %s4, 1712
  %s1882 = scalar_lea.vmem %s1, 1712
  %v1883 = vld [vmem:[%s1882] sm:$0xff]
  %1884 = vst [vmem:[%s1881] sm:$0xff] %v1883
  %s1885 = scalar_lea.vmem %s4, 1720
  %s1886 = scalar_lea.vmem %s1, 1720
  %v1887 = vld [vmem:[%s1886] sm:$0xff]
  %1888 = vst [vmem:[%s1885] sm:$0xff] %v1887
  %s1889 = scalar_lea.vmem %s4, 1728
  %s1890 = scalar_lea.vmem %s1, 1728
  %v1891 = vld [vmem:[%s1890] sm:$0xff]
  %1892 = vst [vmem:[%s1889] sm:$0xff] %v1891
  %s1893 = scalar_lea.vmem %s4, 1736
  %s1894 = scalar_lea.vmem %s1, 1736
  %v1895 = vld [vmem:[%s1894] sm:$0xff]
  %1896 = vst [vmem:[%s1893] sm:$0xff] %v1895
  %s1897 = scalar_lea.vmem %s4, 1744
  %s1898 = scalar_lea.vmem %s1, 1744
  %v1899 = vld [vmem:[%s1898] sm:$0xff]
  %1900 = vst [vmem:[%s1897] sm:$0xff] %v1899
  %s1901 = scalar_lea.vmem %s4, 1752
  %s1902 = scalar_lea.vmem %s1, 1752
  %v1903 = vld [vmem:[%s1902] sm:$0xff]
  %1904 = vst [vmem:[%s1901] sm:$0xff] %v1903
  %s1905 = scalar_lea.vmem %s4, 1760
  %s1906 = scalar_lea.vmem %s1, 1760
  %v1907 = vld [vmem:[%s1906] sm:$0xff]
  %1908 = vst [vmem:[%s1905] sm:$0xff] %v1907
  %s1909 = scalar_lea.vmem %s4, 1768
  %s1910 = scalar_lea.vmem %s1, 1768
  %v1911 = vld [vmem:[%s1910] sm:$0xff]
  %1912 = vst [vmem:[%s1909] sm:$0xff] %v1911
  %s1913 = scalar_lea.vmem %s4, 1776
  %s1914 = scalar_lea.vmem %s1, 1776
  %v1915 = vld [vmem:[%s1914] sm:$0xff]
  %1916 = vst [vmem:[%s1913] sm:$0xff] %v1915
  %s1917 = scalar_lea.vmem %s4, 1784
  %s1918 = scalar_lea.vmem %s1, 1784
  %v1919 = vld [vmem:[%s1918] sm:$0xff]
  %1920 = vst [vmem:[%s1917] sm:$0xff] %v1919
  %s1921 = scalar_lea.vmem %s4, 1792
  %s1922 = scalar_lea.vmem %s1, 1792
  %v1923 = vld [vmem:[%s1922] sm:$0xff]
  %1924 = vst [vmem:[%s1921] sm:$0xff] %v1923
  %s1925 = scalar_lea.vmem %s4, 1800
  %s1926 = scalar_lea.vmem %s1, 1800
  %v1927 = vld [vmem:[%s1926] sm:$0xff]
  %1928 = vst [vmem:[%s1925] sm:$0xff] %v1927
  %s1929 = scalar_lea.vmem %s4, 1808
  %s1930 = scalar_lea.vmem %s1, 1808
  %v1931 = vld [vmem:[%s1930] sm:$0xff]
  %1932 = vst [vmem:[%s1929] sm:$0xff] %v1931
  %s1933 = scalar_lea.vmem %s4, 1816
  %s1934 = scalar_lea.vmem %s1, 1816
  %v1935 = vld [vmem:[%s1934] sm:$0xff]
  %1936 = vst [vmem:[%s1933] sm:$0xff] %v1935
  %s1937 = scalar_lea.vmem %s4, 1824
  %s1938 = scalar_lea.vmem %s1, 1824
  %v1939 = vld [vmem:[%s1938] sm:$0xff]
  %1940 = vst [vmem:[%s1937] sm:$0xff] %v1939
  %s1941 = scalar_lea.vmem %s4, 1832
  %s1942 = scalar_lea.vmem %s1, 1832
  %v1943 = vld [vmem:[%s1942] sm:$0xff]
  %1944 = vst [vmem:[%s1941] sm:$0xff] %v1943
  %s1945 = scalar_lea.vmem %s4, 1840
  %s1946 = scalar_lea.vmem %s1, 1840
  %v1947 = vld [vmem:[%s1946] sm:$0xff]
  %1948 = vst [vmem:[%s1945] sm:$0xff] %v1947
  %s1949 = scalar_lea.vmem %s4, 1848
  %s1950 = scalar_lea.vmem %s1, 1848
  %v1951 = vld [vmem:[%s1950] sm:$0xff]
  %1952 = vst [vmem:[%s1949] sm:$0xff] %v1951
  %s1953 = scalar_lea.vmem %s4, 1856
  %s1954 = scalar_lea.vmem %s1, 1856
  %v1955 = vld [vmem:[%s1954] sm:$0xff]
  %1956 = vst [vmem:[%s1953] sm:$0xff] %v1955
  %s1957 = scalar_lea.vmem %s4, 1864
  %s1958 = scalar_lea.vmem %s1, 1864
  %v1959 = vld [vmem:[%s1958] sm:$0xff]
  %1960 = vst [vmem:[%s1957] sm:$0xff] %v1959
  %s1961 = scalar_lea.vmem %s4, 1872
  %s1962 = scalar_lea.vmem %s1, 1872
  %v1963 = vld [vmem:[%s1962] sm:$0xff]
  %1964 = vst [vmem:[%s1961] sm:$0xff] %v1963
  %s1965 = scalar_lea.vmem %s4, 1880
  %s1966 = scalar_lea.vmem %s1, 1880
  %v1967 = vld [vmem:[%s1966] sm:$0xff]
  %1968 = vst [vmem:[%s1965] sm:$0xff] %v1967
  %s1969 = scalar_lea.vmem %s4, 1888
  %s1970 = scalar_lea.vmem %s1, 1888
  %v1971 = vld [vmem:[%s1970] sm:$0xff]
  %1972 = vst [vmem:[%s1969] sm:$0xff] %v1971
  %s1973 = scalar_lea.vmem %s4, 1896
  %s1974 = scalar_lea.vmem %s1, 1896
  %v1975 = vld [vmem:[%s1974] sm:$0xff]
  %1976 = vst [vmem:[%s1973] sm:$0xff] %v1975
  %s1977 = scalar_lea.vmem %s4, 1904
  %s1978 = scalar_lea.vmem %s1, 1904
  %v1979 = vld [vmem:[%s1978] sm:$0xff]
  %1980 = vst [vmem:[%s1977] sm:$0xff] %v1979
  %s1981 = scalar_lea.vmem %s4, 1912
  %s1982 = scalar_lea.vmem %s1, 1912
  %v1983 = vld [vmem:[%s1982] sm:$0xff]
  %1984 = vst [vmem:[%s1981] sm:$0xff] %v1983
  %s1985 = scalar_lea.vmem %s4, 1920
  %s1986 = scalar_lea.vmem %s1, 1920
  %v1987 = vld [vmem:[%s1986] sm:$0xff]
  %1988 = vst [vmem:[%s1985] sm:$0xff] %v1987
  %s1989 = scalar_lea.vmem %s4, 1928
  %s1990 = scalar_lea.vmem %s1, 1928
  %v1991 = vld [vmem:[%s1990] sm:$0xff]
  %1992 = vst [vmem:[%s1989] sm:$0xff] %v1991
  %s1993 = scalar_lea.vmem %s4, 1936
  %s1994 = scalar_lea.vmem %s1, 1936
  %v1995 = vld [vmem:[%s1994] sm:$0xff]
  %1996 = vst [vmem:[%s1993] sm:$0xff] %v1995
  %s1997 = scalar_lea.vmem %s4, 1944
  %s1998 = scalar_lea.vmem %s1, 1944
  %v1999 = vld [vmem:[%s1998] sm:$0xff]
  %2000 = vst [vmem:[%s1997] sm:$0xff] %v1999
  %s2001 = scalar_lea.vmem %s4, 1952
  %s2002 = scalar_lea.vmem %s1, 1952
  %v2003 = vld [vmem:[%s2002] sm:$0xff]
  %2004 = vst [vmem:[%s2001] sm:$0xff] %v2003
  %s2005 = scalar_lea.vmem %s4, 1960
  %s2006 = scalar_lea.vmem %s1, 1960
  %v2007 = vld [vmem:[%s2006] sm:$0xff]
  %2008 = vst [vmem:[%s2005] sm:$0xff] %v2007
  %s2009 = scalar_lea.vmem %s4, 1968
  %s2010 = scalar_lea.vmem %s1, 1968
  %v2011 = vld [vmem:[%s2010] sm:$0xff]
  %2012 = vst [vmem:[%s2009] sm:$0xff] %v2011
  %s2013 = scalar_lea.vmem %s4, 1976
  %s2014 = scalar_lea.vmem %s1, 1976
  %v2015 = vld [vmem:[%s2014] sm:$0xff]
  %2016 = vst [vmem:[%s2013] sm:$0xff] %v2015
  %s2017 = scalar_lea.vmem %s4, 1984
  %s2018 = scalar_lea.vmem %s1, 1984
  %v2019 = vld [vmem:[%s2018] sm:$0xff]
  %2020 = vst [vmem:[%s2017] sm:$0xff] %v2019
  %s2021 = scalar_lea.vmem %s4, 1992
  %s2022 = scalar_lea.vmem %s1, 1992
  %v2023 = vld [vmem:[%s2022] sm:$0xff]
  %2024 = vst [vmem:[%s2021] sm:$0xff] %v2023
  %s2025 = scalar_lea.vmem %s4, 2000
  %s2026 = scalar_lea.vmem %s1, 2000
  %v2027 = vld [vmem:[%s2026] sm:$0xff]
  %2028 = vst [vmem:[%s2025] sm:$0xff] %v2027
  %s2029 = scalar_lea.vmem %s4, 2008
  %s2030 = scalar_lea.vmem %s1, 2008
  %v2031 = vld [vmem:[%s2030] sm:$0xff]
  %2032 = vst [vmem:[%s2029] sm:$0xff] %v2031
  %s2033 = scalar_lea.vmem %s4, 2016
  %s2034 = scalar_lea.vmem %s1, 2016
  %v2035 = vld [vmem:[%s2034] sm:$0xff]
  %2036 = vst [vmem:[%s2033] sm:$0xff] %v2035
  %s2037 = scalar_lea.vmem %s4, 2024
  %s2038 = scalar_lea.vmem %s1, 2024
  %v2039 = vld [vmem:[%s2038] sm:$0xff]
  %2040 = vst [vmem:[%s2037] sm:$0xff] %v2039
  %s2041 = scalar_lea.vmem %s4, 2032
  %s2042 = scalar_lea.vmem %s1, 2032
  %v2043 = vld [vmem:[%s2042] sm:$0xff]
  %2044 = vst [vmem:[%s2041] sm:$0xff] %v2043
  %s2045 = scalar_lea.vmem %s4, 2040
  %s2046 = scalar_lea.vmem %s1, 2040
  %v2047 = vld [vmem:[%s2046] sm:$0xff]
  %2048 = vst [vmem:[%s2045] sm:$0xff] %v2047

</llo_original>
